<compile_context>
chip_gen: v7x
topology: tpu7x:2x2x1
jax: 0.10.0
libtpu: 0.0.40
codegen_flags: <defaults>
</compile_context>

<pallas_src>
import jax
import jax.numpy as jnp
from jax.experimental import pallas as pl
from jax.experimental.pallas import tpu as pltpu


def _interp_matrix(out_size: int, in_size: int) -> jnp.ndarray:
    """Dense (out_size, in_size) matrix reproducing PyTorch's bilinear resize
    (mode='bilinear', align_corners=False) along one axis."""
    o = jnp.arange(out_size, dtype=jnp.float32)
    scale = in_size / out_size
    src = scale * (o + 0.5) - 0.5
    src = jnp.maximum(src, 0.0)                      # PyTorch clamps negative source idx
    low = jnp.floor(src).astype(jnp.int32)
    low = jnp.minimum(low, in_size - 1)
    high = jnp.minimum(low + 1, in_size - 1)
    frac = src - low.astype(jnp.float32)
    return (jax.nn.one_hot(low, in_size, dtype=jnp.float32) * (1.0 - frac)[:, None]
            + jax.nn.one_hot(high, in_size, dtype=jnp.float32) * frac[:, None])


def _masked_bce(s_res, t_res, gt):
    """Masked-teacher BCE, PyTorch F.binary_cross_entropy semantics (log clamp -100).

    log sigmoid(x)      = min(x,0) - log(1 + exp(-|x|))
    log(1 - sigmoid(x)) = log sigmoid(x) - x
    One exp + one log per element.  NOTE: PyTorch's sigmoid-then-log rounds 1-p to 0
    (clamp fires) for logits >~ 17; this identity stays finite there -- mathematically
    more accurate but not bit-faithful at such extremes (never hit by N(0,1) inputs).
    """
    t_prob = jax.nn.sigmoid(t_res * gt)
    # log(1+exp(-|x|)) with argument >= 1: plain log is exact enough; the log1p form
    # suggested in review is numerically/性能-equivalent here (the add co-issues on VPU).
    log_sig = jnp.minimum(s_res, 0.0) - jnp.log(1.0 + jnp.exp(-jnp.abs(s_res)))
    log_p = jnp.maximum(log_sig, -100.0)
    log_1mp = jnp.maximum(log_sig - s_res, -100.0)
    # == -(t*log_p + (1-t)*log_1mp), one fewer vmul+vsub per element.
    return -(log_1mp + t_prob * (log_p - log_1mp))


def _fused_kernel(s_ref, t_ref, gt_ref, ws_ref, wt_ref, out_ref):
    """Fused-resize path: one lane-dense matmul per stream, then BCE."""
    f32 = jnp.float32
    s_res = jnp.dot(s_ref[...], ws_ref[...], preferred_element_type=f32)   # (G, H*W)
    t_res = jnp.dot(t_ref[...], wt_ref[...], preferred_element_type=f32)   # (G, H*W)
    gt = gt_ref[...].astype(f32)                                           # (1, H*W)
    bce = _masked_bce(s_res, t_res, gt)                                    # (G, H*W)
    out_ref[...] = jnp.sum(bce, axis=0, keepdims=True)                     # (1, H*W)


def _separable_kernel(s_ref, t_ref, gt_ref, wrs_ref, wcs_ref, wrt_ref, wct_ref, out_ref):
    """Separable-resize fallback (large spatial inputs): column pass folded into one
    matmul, row pass batched against SHARED row weights (broadcast in-register only)."""
    f32 = jnp.float32
    G, Hs, Ws = s_ref.shape
    _, Ht, Wt = t_ref.shape
    H, W = gt_ref.shape

    # Column pass: ONE (G*Hs, Ws) @ (Ws, W) matmul per stream.
    s_cols = jnp.dot(s_ref[...].reshape(G * Hs, Ws), wcs_ref[...],
                     preferred_element_type=f32).reshape(G, Hs, W)
    t_cols = jnp.dot(t_ref[...].reshape(G * Ht, Wt), wct_ref[...],
                     preferred_element_type=f32).reshape(G, Ht, W)

    # Row pass: shared (H,Hs)/(H,Ht) weights live ONCE in VMEM; broadcast in-register
    # for the batched matmul (no per-G copies in HBM / pipeline buffers).
    wrs_b = jnp.broadcast_to(wrs_ref[...][None], (G, H, Hs))
    wrt_b = jnp.broadcast_to(wrt_ref[...][None], (G, H, Ht))
    s_res = jnp.einsum("ghk,gkw->ghw", wrs_b, s_cols, preferred_element_type=f32)
    t_res = jnp.einsum("ghk,gkw->ghw", wrt_b, t_cols, preferred_element_type=f32)

    gt = gt_ref[...].astype(f32)[None, :, :]                               # (1, H, W)
    bce = _masked_bce(s_res, t_res, gt)                                    # (G, H, W)
    out_ref[...] = jnp.sum(jnp.sum(bce, axis=0), axis=0, keepdims=True)    # (1, W)


def masked_bce_loss_with_masked_teacher(
        student_logits, teacher_logits, ground_truth, *,
        group_size=None,
        resize_impl=None,                       # None (auto) | "fused" | "separable"
        vmem_budget_bytes=24 * 1024 * 1024,     # per-step working-set target: safe on all
                                                # gens; raise to ~48-64 MiB on v5e/v6e,
                                                # keep <= ~40 MiB on v7x (64 MiB physical)
        vmem_limit_bytes=None):
    B, C, Hs, Ws = student_logits.shape
    Bt, Ct, Ht, Wt = teacher_logits.shape
    Bg, H, W = ground_truth.shape
    assert B == Bt == Bg and C == Ct

    in_s = student_logits.dtype.itemsize
    in_t = teacher_logits.dtype.itemsize
    gt_b = ground_truth.dtype.itemsize
    Ks, Kt, HW = Hs * Ws, Ht * Wt, H * W

    # --- fully-accounted per-step VMEM footprints (review: include double-buffered
    # input blocks, the resize operators, and the f32 intermediates) ---------------
    def bytes_fused(g):
        return (2 * g * Ks * in_s + 2 * g * Kt * in_t + 2 * HW * gt_b     # dbl-buf inputs
                + 2 * (Ks + Kt) * HW * 4                                  # dbl-buf Wcomb ops
                + 6 * g * HW * 4                                          # f32 intermediates
                + 2 * HW * 4)                                             # output block

    def bytes_separable(g):
        return (2 * g * Ks * in_s + 2 * g * Kt * in_t + 2 * HW * gt_b
                + 2 * 4 * (H * Hs + Ws * W + H * Ht + Wt * W)             # dbl-buf weights
                + 4 * g * (Hs + Ht) * W + 4 * g * H * (Hs + Ht)           # cols + bcast wts
                + 6 * g * HW * 4 + 2 * W * 4)

    if resize_impl is None:
        # Prefer the fused Kronecker operators whenever they (plus a minimal channel
        # block) fit the budget -- i.e. for small spatial inputs, where the separable
        # form would otherwise run the MXU at <10% column occupancy.
        resize_impl = "fused" if bytes_fused(1) <= vmem_budget_bytes else "separable"
    fused = resize_impl == "fused"
    bytes_for_g = bytes_fused if fused else bytes_separable

    # --- channel-block size G: largest divisor of C under the budget, sublane-aligned
    # in the fused path, and leaving >= 2 grid steps so both v7x TCs get work --------
    if group_size is None:
        divisors = [g for g in range(1, C + 1) if C % g == 0]
        if B == 1 and C > 1:
            two_step = [g for g in divisors if C // g >= 2]
            divisors = two_step or divisors
        if fused:
            aligned = [g for g in divisors if g == C or g % 8 == 0]
            divisors = aligned or divisors
        fitting = [g for g in divisors if bytes_for_g(g) <= vmem_budget_bytes]
        group_size = max(fitting) if fitting else min(divisors)
        # TODO(synk): if C is prime/awkward, pad the channel axis (and drop the padded
        # channels' partials) so G can still hit the MXU-M / 8-sublane targets.
    G = group_size
    assert C % G == 0, "group_size must divide the channel count"
    n_cblocks = C // G

    if vmem_limit_bytes is None:
        vmem_limit_bytes = max(32 * 1024 * 1024, int(bytes_for_g(G)) + 4 * 1024 * 1024)
    cparams = pltpu.CompilerParams(
        dimension_semantics=("parallel", "parallel"),   # no cross-step state anywhere
        vmem_limit_bytes=int(vmem_limit_bytes))

    # Exact PyTorch bilinear (align_corners=False) interpolation matrices.
    wrs = _interp_matrix(H, Hs)     # (H, Hs)  rows, student
    wrt = _interp_matrix(H, Ht)     # (H, Ht)  rows, teacher
    wcs = _interp_matrix(W, Ws)     # (W, Ws)  cols, student
    wct = _interp_matrix(W, Wt)     # (W, Wt)  cols, teacher

    # NOTE: the weight (and gt) inputs have constant index_maps and are DMA'd once;
    # pipeline_mode=pl.Buffered(1) on their BlockSpecs would reclaim the second
    # pipeline buffer (left at the default here for broad toolchain compatibility).
    if fused:
        # out[g, h*W+w] = sum_{i,j} Wr[h,i] Wc[w,j] x[g, i*Ws+j]  ==  X @ kron(Wr,Wc)^T
        ws_op = jnp.kron(wrs, wcs).T        # (Hs*Ws, H*W)
        wt_op = jnp.kron(wrt, wct).T        # (Ht*Wt, H*W)
        s_flat = student_logits.reshape(B, C, Ks)
        t_flat = teacher_logits.reshape(B, C, Kt)
        gt_flat = ground_truth.reshape(B, 1, HW)
        partials = pl.pallas_call(
            _fused_kernel,
            out_shape=jax.ShapeDtypeStruct((B, n_cblocks, 1, HW), jnp.float32),
            grid_spec=pltpu.PrefetchScalarGridSpec(
                num_scalar_prefetch=0,
                grid=(B, n_cblocks),
                in_specs=[
                    pl.BlockSpec((None, G, Ks), lambda b, cb: (b, cb, 0)),
                    pl.BlockSpec((None, G, Kt), lambda b, cb: (b, cb, 0)),
                    pl.BlockSpec((None, 1, HW), lambda b, cb: (b, 0, 0)),
                    pl.BlockSpec((Ks, HW), lambda b, cb: (0, 0)),
                    pl.BlockSpec((Kt, HW), lambda b, cb: (0, 0)),
                ],
                out_specs=pl.BlockSpec((None, None, 1, HW), lambda b, cb: (b, cb, 0, 0)),
            ),
            compiler_params=cparams,
        )(s_flat, t_flat, gt_flat, ws_op, wt_op)
    else:
        # TODO(synk): if W is not a multiple of 128 on this path, pad the output lane
        # dim (with in-kernel masking) to avoid per-step masked vst.msk stores.
        partials = pl.pallas_call(
            _separable_kernel,
            out_shape=jax.ShapeDtypeStruct((B, n_cblocks, 1, W), jnp.float32),
            grid_spec=pltpu.PrefetchScalarGridSpec(
                num_scalar_prefetch=0,
                grid=(B, n_cblocks),
                in_specs=[
                    pl.BlockSpec((None, G, Hs, Ws), lambda b, cb: (b, cb, 0, 0)),
                    pl.BlockSpec((None, G, Ht, Wt), lambda b, cb: (b, cb, 0, 0)),
                    pl.BlockSpec((None, H, W), lambda b, cb: (b, 0, 0)),
                    pl.BlockSpec((H, Hs), lambda b, cb: (0, 0)),
                    pl.BlockSpec((Ws, W), lambda b, cb: (0, 0)),
                    pl.BlockSpec((H, Ht), lambda b, cb: (0, 0)),
                    pl.BlockSpec((Wt, W), lambda b, cb: (0, 0)),
                ],
                out_specs=pl.BlockSpec((None, None, 1, W), lambda b, cb: (b, cb, 0, 0)),
            ),
            compiler_params=cparams,
        )(student_logits, teacher_logits, ground_truth, wrs, wcs.T, wrt, wct.T)

    return jnp.sum(partials) * (1.0 / float(B * C * H * W))


def _reference_loss(student_logits, teacher_logits, ground_truth):
    """Pure-JAX reference (PyTorch-faithful sigmoid-then-log formulation)."""
    _, _, Hs, Ws = student_logits.shape
    _, _, Ht, Wt = teacher_logits.shape
    _, H, W = ground_truth.shape
    wrs = _interp_matrix(H, Hs)
    wcs = _interp_matrix(W, Ws)
    wrt = _interp_matrix(H, Ht)
    wct = _interp_matrix(W, Wt)
    s_res = jnp.einsum("ph,bchw,qw->bcpq", wrs, student_logits, wcs, precision="highest")
    t_res = jnp.einsum("ph,bchw,qw->bcpq", wrt, teacher_logits, wct, precision="highest")
    masked_t = t_res * ground_truth[:, None]
    s_prob = jax.nn.sigmoid(s_res)
    t_prob = jax.nn.sigmoid(masked_t)
    log_p = jnp.maximum(jnp.log(s_prob), -100.0)
    log_1mp = jnp.maximum(jnp.log(1.0 - s_prob), -100.0)
    return jnp.mean(-(t_prob * log_p + (1.0 - t_prob) * log_1mp))


if __name__ == "__main__":
    key = jax.random.PRNGKey(0)
    k1, k2, k3 = jax.random.split(key, 3)

    B, C = 2, 8
    Hs, Ws = 8, 8          # student logits spatial size
    Ht, Wt = 16, 16        # teacher logits spatial size
    H, W = 32, 32          # ground-truth spatial size

    student_logits = jax.random.normal(k1, (B, C, Hs, Ws), dtype=jnp.float32)
    teacher_logits = jax.random.normal(k2, (B, C, Ht, Wt), dtype=jnp.float32)
    ground_truth = jax.random.bernoulli(k3, 0.5, (B, H, W)).astype(jnp.float32)

    ref = _reference_loss(student_logits, teacher_logits, ground_truth)

    # Primary (auto) path: fused Kronecker resize operator.
    loss_fused = jax.block_until_ready(
        masked_bce_loss_with_masked_teacher(student_logits, teacher_logits, ground_truth))
    assert jnp.allclose(loss_fused, ref, rtol=2e-3, atol=2e-3), (loss_fused, ref)

    # Large-spatial fallback path (separable resize, shared row weights) -- exercised
    # explicitly so both code paths are validated against the reference.
    loss_sep = jax.block_until_ready(
        masked_bce_loss_with_masked_teacher(student_logits, teacher_logits, ground_truth,
                                            resize_impl="separable"))
    assert jnp.allclose(loss_sep, ref, rtol=2e-3, atol=2e-3), (loss_sep, ref)

    print("KERNEL_OK")
</pallas_src>

<mosaic_0001>
module attributes {stable_mosaic.version = 11 : i64} {
  func.func @_fused_kernel(%arg0: i32, %arg1: i32, %arg2: memref<1x8x64xf32, #tpu.memory_space<vmem>>, %arg3: memref<1x8x256xf32, #tpu.memory_space<vmem>>, %arg4: memref<1x1x1024xf32, #tpu.memory_space<vmem>>, %arg5: memref<64x1024xf32, #tpu.memory_space<vmem>>, %arg6: memref<256x1024xf32, #tpu.memory_space<vmem>>, %arg7: memref<1x1x1x1024xf32, #tpu.memory_space<vmem>>) attributes {dimension_semantics = [#tpu.dimension_semantics<parallel>, #tpu.dimension_semantics<parallel>], iteration_bounds = array<i64: 2, 1>, scalar_prefetch = 0 : i64, scratch_operands = 0 : i64, tpu.core_type = #tpu.core_type<tc>, window_params = [{transform_indices = @transform_0, window_bounds = array<i64: 1, 8, 64>}, {transform_indices = @transform_1, window_bounds = array<i64: 1, 8, 256>}, {transform_indices = @transform_2, window_bounds = array<i64: 1, 1, 1024>}, {pipeline_mode = #tpu.pipeline_mode<synchronous>, transform_indices = @transform_3, window_bounds = array<i64: 64, 1024>}, {pipeline_mode = #tpu.pipeline_mode<synchronous>, transform_indices = @transform_4, window_bounds = array<i64: 256, 1024>}, {transform_indices = @transform_5, window_bounds = array<i64: 1, 1, 1, 1024>}]} {
    %c0 = arith.constant 0 : index
    %c0_0 = arith.constant 0 : index
    %c0_1 = arith.constant 0 : index
    %0 = vector.load %arg2[%c0, %c0_0, %c0_1] : memref<1x8x64xf32, #tpu.memory_space<vmem>>, vector<1x8x64xf32>
    %1 = vector.shape_cast %0 : vector<1x8x64xf32> to vector<8x64xf32>
    %c0_2 = arith.constant 0 : index
    %c0_3 = arith.constant 0 : index
    %2 = vector.load %arg5[%c0_2, %c0_3] : memref<64x1024xf32, #tpu.memory_space<vmem>>, vector<64x1024xf32>
    %cst = arith.constant dense<0.000000e+00> : vector<8x1024xf32>
    %3 = tpu.matmul %1, %2, %cst {dimension_numbers = #tpu.dot_dimension_numbers<[1], [0], [0], [1], [0, 0, 1, 1], [], []>} : vector<8x64xf32>, vector<64x1024xf32>, vector<8x1024xf32> -> vector<8x1024xf32>
    %c0_4 = arith.constant 0 : index
    %c0_5 = arith.constant 0 : index
    %c0_6 = arith.constant 0 : index
    %4 = vector.load %arg3[%c0_4, %c0_5, %c0_6] : memref<1x8x256xf32, #tpu.memory_space<vmem>>, vector<1x8x256xf32>
    %5 = vector.shape_cast %4 : vector<1x8x256xf32> to vector<8x256xf32>
    %c0_7 = arith.constant 0 : index
    %c0_8 = arith.constant 0 : index
    %6 = vector.load %arg6[%c0_7, %c0_8] : memref<256x1024xf32, #tpu.memory_space<vmem>>, vector<256x1024xf32>
    %cst_9 = arith.constant dense<0.000000e+00> : vector<8x1024xf32>
    %7 = tpu.matmul %5, %6, %cst_9 {dimension_numbers = #tpu.dot_dimension_numbers<[1], [0], [0], [1], [0, 0, 1, 1], [], []>} : vector<8x256xf32>, vector<256x1024xf32>, vector<8x1024xf32> -> vector<8x1024xf32>
    %c0_10 = arith.constant 0 : index
    %c0_11 = arith.constant 0 : index
    %c0_12 = arith.constant 0 : index
    %8 = vector.load %arg4[%c0_10, %c0_11, %c0_12] : memref<1x1x1024xf32, #tpu.memory_space<vmem>>, vector<1x1x1024xf32>
    %9 = vector.shape_cast %8 : vector<1x1x1024xf32> to vector<1x1024xf32>
    %10 = vector.broadcast %9 : vector<1x1024xf32> to vector<8x1024xf32>
    %11 = arith.mulf %7, %10 : vector<8x1024xf32>
    %12 = arith.negf %11 : vector<8x1024xf32>
    %13 = math.exp %12 : vector<8x1024xf32>
    %cst_13 = arith.constant 1.000000e+00 : f32
    %14 = vector.broadcast %cst_13 : f32 to vector<8x1024xf32>
    %15 = arith.addf %14, %13 : vector<8x1024xf32>
    %16 = arith.divf %14, %15 : vector<8x1024xf32>
    %cst_14 = arith.constant 0.000000e+00 : f32
    %17 = vector.broadcast %cst_14 : f32 to vector<8x1024xf32>
    %18 = arith.minimumf %3, %17 : vector<8x1024xf32>
    %19 = math.absf %3 : vector<8x1024xf32>
    %cst_15 = arith.constant 0.000000e+00 : f32
    %20 = vector.broadcast %cst_15 : f32 to vector<8x1024xf32>
    %21 = arith.subf %20, %19 : vector<8x1024xf32>
    %22 = math.exp %21 : vector<8x1024xf32>
    %cst_16 = arith.constant 1.000000e+00 : f32
    %23 = vector.broadcast %cst_16 : f32 to vector<8x1024xf32>
    %24 = arith.addf %23, %22 : vector<8x1024xf32>
    %25 = math.log %24 : vector<8x1024xf32>
    %26 = arith.subf %18, %25 : vector<8x1024xf32>
    %cst_17 = arith.constant -1.000000e+02 : f32
    %27 = vector.broadcast %cst_17 : f32 to vector<8x1024xf32>
    %28 = arith.maximumf %26, %27 : vector<8x1024xf32>
    %29 = arith.subf %26, %3 : vector<8x1024xf32>
    %cst_18 = arith.constant -1.000000e+02 : f32
    %30 = vector.broadcast %cst_18 : f32 to vector<8x1024xf32>
    %31 = arith.maximumf %29, %30 : vector<8x1024xf32>
    %32 = arith.subf %28, %31 : vector<8x1024xf32>
    %33 = arith.mulf %16, %32 : vector<8x1024xf32>
    %34 = arith.addf %31, %33 : vector<8x1024xf32>
    %cst_19 = arith.constant 0.000000e+00 : f32
    %35 = vector.broadcast %cst_19 : f32 to vector<8x1024xf32>
    %36 = arith.subf %35, %34 : vector<8x1024xf32>
    %cst_20 = arith.constant dense<0.000000e+00> : vector<1024xf32>
    %37 = vector.multi_reduction <add>, %36, %cst_20 [0] : vector<8x1024xf32> to vector<1024xf32>
    %38 = vector.shape_cast %37 : vector<1024xf32> to vector<1x1024xf32>
    %c0_21 = arith.constant 0 : index
    %c0_22 = arith.constant 0 : index
    %c0_23 = arith.constant 0 : index
    %c0_24 = arith.constant 0 : index
    %39 = vector.load %arg7[%c0_21, %c0_22, %c0_23, %c0_24] : memref<1x1x1x1024xf32, #tpu.memory_space<vmem>>, vector<1x1x1x1024xf32>
    %40 = vector.shape_cast %39 : vector<1x1x1x1024xf32> to vector<1x1024xf32>
    %41 = vector.shape_cast %38 : vector<1x1024xf32> to vector<1x1x1x1024xf32>
    tpu.vector_store %arg7[%c0_21, %c0_22, %c0_23, %c0_24], %41 {strides = array<i32>} : memref<1x1x1x1024xf32, #tpu.memory_space<vmem>>, vector<1x1x1x1024xf32>,
    return
  }
  func.func @transform_0(%arg0: i32, %arg1: i32) -> (i32, i32, i32) {
    %c0_i32 = arith.constant 0 : i32
    %c0_i32_0 = arith.constant 0 : i32
    return %arg0, %arg1, %c0_i32 : i32, i32, i32
  }
  func.func @transform_1(%arg0: i32, %arg1: i32) -> (i32, i32, i32) {
    %c0_i32 = arith.constant 0 : i32
    %c0_i32_0 = arith.constant 0 : i32
    return %arg0, %arg1, %c0_i32 : i32, i32, i32
  }
  func.func @transform_2(%arg0: i32, %arg1: i32) -> (i32, i32, i32) {
    %c0_i32 = arith.constant 0 : i32
    %c0_i32_0 = arith.constant 0 : i32
    %c0_i32_1 = arith.constant 0 : i32
    return %arg0, %c0_i32, %c0_i32_0 : i32, i32, i32
  }
  func.func @transform_3(%arg0: i32, %arg1: i32) -> (i32, i32) {
    %c0_i32 = arith.constant 0 : i32
    %c0_i32_0 = arith.constant 0 : i32
    %c0_i32_1 = arith.constant 0 : i32
    return %c0_i32, %c0_i32_0 : i32, i32
  }
  func.func @transform_4(%arg0: i32, %arg1: i32) -> (i32, i32) {
    %c0_i32 = arith.constant 0 : i32
    %c0_i32_0 = arith.constant 0 : i32
    %c0_i32_1 = arith.constant 0 : i32
    return %c0_i32, %c0_i32_0 : i32, i32
  }
  func.func @transform_5(%arg0: i32, %arg1: i32) -> (i32, i32, i32, i32) {
    %c0_i32 = arith.constant 0 : i32
    %c0_i32_0 = arith.constant 0 : i32
    %c0_i32_1 = arith.constant 0 : i32
    return %arg0, %arg1, %c0_i32, %c0_i32_0 : i32, i32, i32, i32
  }
}

</mosaic_0001>

<llo_original>
// kernel: tpu_custom_call.1
$region0: #{tpu_custom_call.1}
  #allocation0 [shape = 'u32[]', space=smem, size = 0x4, offset = 0x4, fixed_abs, tag = 'smem constant byte address 0x4 - core index']
  #allocation1 [shape = 'u32[144,128]{1,0:T(1,128)}', space=vmem, size = 0x12000, scoped, tag = 'internal scratch']
  %s0 = inlined_call_operand.hbm [shape: f32[2,8,64], index: 0, kind: input, shape index: {}]
  %s1 = inlined_call_operand.hbm [shape: f32[2,8,256], index: 1, kind: input, shape index: {}]
  %s2 = inlined_call_operand.hbm [shape: f32[2,1,1024], index: 2, kind: input, shape index: {}]
  %s3 = inlined_call_operand.hbm [shape: f32[64,1024], index: 3, kind: input, shape index: {}]
  %s4 = inlined_call_operand.hbm [shape: f32[256,1024], index: 4, kind: input, shape index: {}]
  %s5 = inlined_call_operand.hbm [shape: f32[2,1,1,1024], index: 5, kind: output, shape index: {}]
  %s6 = sld [smem:[#allocation0]]
  $region73: #{tpu_custom_call.1} parent=0
    _
  %s8 = ssub.s32 1, %s6
  %s9 = scalar_select 0, %s8, %s6
  $region1: #{tpu_custom_call.1} parent=0
    #allocation2 [shape = 'u8[8192]{0}', space=vmem, size = 0x2000, scoped, tag = 'input window, operand 0']
    #allocation3 [shape = 's32[2]{0}', space=sflag, size = 0x8, scoped, tag = 'scoped memory for tpu_custom_call.1']
    #allocation4 [shape = 's32[2]{0}', space=sflag, size = 0x8, scoped, tag = 'scoped memory for tpu_custom_call.1']
    #allocation5 [shape = 'u8[16384]{0}', space=vmem, size = 0x4000, scoped, tag = 'input window, operand 1']
    #allocation6 [shape = 's32[2]{0}', space=sflag, size = 0x8, scoped, tag = 'scoped memory for tpu_custom_call.1']
    #allocation7 [shape = 'u8[8192]{0}', space=vmem, size = 0x2000, scoped, tag = 'input window, operand 2']
    #allocation8 [shape = 'u8[262144]{0}', space=vmem, size = 0x40000, scoped, tag = 'input window, operand 3, single buffered']
    #allocation9 [shape = 's32[1]{0}', space=sflag, size = 0x4, scoped, tag = 'scoped memory for tpu_custom_call.1']
    #allocation10 [shape = 'u8[1048576]{0}', space=vmem, size = 0x100000, scoped, tag = 'input window, operand 4, single buffered']
    #allocation11 [shape = 'u8[8192]{0}', space=vmem, size = 0x2000, scoped, tag = 'output window, operand 0']
    %10 = vsyncpa [#allocation3], 0
    %s11 = scalar_lea.sflag [#allocation3], 1
    %12 = vsyncpa %s11, 0
    %13 = vsyncpa [#allocation6], 0
    %s14 = scalar_lea.sflag [#allocation6], 1
    %15 = vsyncpa %s14, 0
    %16 = vsyncpa [#allocation9], 0
    %17 = vsyncpa [#allocation4], 0
    %s18 = scalar_lea.sflag [#allocation4], 1
    %19 = vsyncpa %s18, 0
    loop: start=0, step=1, limit=4
    $region2: #{tpu_custom_call.1} parent=1 // loop_pre_header
      _
    $region3: #{tpu_custom_call.1} parent=1 // loop_header
      %s21 = sphi 0, %s25
      %p22 = scmp.ge.s32.totalorder %s21, 4
      %s28 = sphi 0, %s40
      %s29 = sphi 0, %s36
      %s30 = sphi 0, %s28
      %s31 = sphi 0, %s29
      %s32 = sphi 0, %s30
      %s33 = sphi 0, %s31
      %s45 = sphi 0, %s47
      %s48 = sphi 0, %s45
      %s49 = sphi 0, %s48
      %s65 = sphi 0, %s49
      %s73 = sphi 0, %s75
      %s76 = sphi 0, %s73
      %s77 = sphi 0, %s76
      %s93 = sphi 0, %s77
      %s99 = sphi 0, %s101
      %s102 = sphi 0, %s99
      %s103 = sphi 0, %s102
      %s119 = sphi 0, %s103
      %s123 = sphi 0, %s123
      %s125 = sphi 0, %s123
      %s126 = sphi 0, %s125
      %s140 = sphi 0, %s126
      %s144 = sphi 0, %s144
      %s146 = sphi 0, %s144
      %s147 = sphi 0, %s146
      %s161 = sphi 0, %s147
      %s169 = sphi 0, %s171
      %s172 = sphi 0, %s169
      %s173 = sphi 0, %s172
      %s189 = sphi 0, %s173
    $region4: #{tpu_custom_call.1} parent=1 // loop_header_branch
      %24 = sbr.rel (%p22) target = $region8
    $region5: #{tpu_custom_call.1} parent=1 // loop_body
      %s26 = ssub.s32 %s21, 1
      %s27 = ssub.s32 %s21, 2
      %s34 = sadd.s32 1, %s29
      %p35 = scmp.ge.s32.totalorder %s34, 1
      %s36 = scalar_select %p35, 0, %s34
      %s37 = sadd.s32 1, %s28
      %s38 = scalar_select %p35, %s37, %s28
      %p39 = scmp.ge.s32.totalorder %s38, 2
      %s40 = scalar_select %p39, 0, %s38
      %s41 = ssub.s32 %s28, %s40
      %s42 = ssub.s32 %s29, %s36
      %s43 = sor.u32 %s41, %s42
      %p44 = scmp.eq.s32.totalorder %s43, 0
      %s46 = sadd.s32 %s45, 1
      %s47 = scalar_select %p44, %s45, %s46
      %p50 = pneg %p44
      %p51 = scmp.eq.s32.totalorder %s21, 1
      %p52 = por %p50, %p51
      %p53 = scmp.ne.s32.totalorder %s45, %s48
      %p54 = scmp.eq.s32.totalorder %s21, 0
      %p55 = por %p53, %p54
      %p56 = scmp.ne.s32.totalorder %s45, %s48
      %p57 = scmp.eq.s32.totalorder %s26, 1
      %p58 = por %p56, %p57
      %p59 = scmp.ne.s32.totalorder %s48, %s49
      %p60 = scmp.eq.s32.totalorder %s26, 0
      %p61 = por %p59, %p60
      %p62 = scmp.ne.s32.totalorder %s48, %s49
      %p63 = scmp.eq.s32.totalorder %s27, 1
      %p64 = por %p62, %p63
      %p66 = scmp.ne.s32.totalorder %s49, %s65
      %p67 = scmp.eq.s32.totalorder %s27, 0
      %p68 = por %p66, %p67
      %s69 = ssub.s32 %s28, %s40
      %s70 = ssub.s32 %s29, %s36
      %s71 = sor.u32 %s69, %s70
      %p72 = scmp.eq.s32.totalorder %s71, 0
      %s74 = sadd.s32 %s73, 1
      %s75 = scalar_select %p72, %s73, %s74
      %p78 = pneg %p72
      %p79 = scmp.eq.s32.totalorder %s21, 1
      %p80 = por %p78, %p79
      %p81 = scmp.ne.s32.totalorder %s73, %s76
      %p82 = scmp.eq.s32.totalorder %s21, 0
      %p83 = por %p81, %p82
      %p84 = scmp.ne.s32.totalorder %s73, %s76
      %p85 = scmp.eq.s32.totalorder %s26, 1
      %p86 = por %p84, %p85
      %p87 = scmp.ne.s32.totalorder %s76, %s77
      %p88 = scmp.eq.s32.totalorder %s26, 0
      %p89 = por %p87, %p88
      %p90 = scmp.ne.s32.totalorder %s76, %s77
      %p91 = scmp.eq.s32.totalorder %s27, 1
      %p92 = por %p90, %p91
      %p94 = scmp.ne.s32.totalorder %s77, %s93
      %p95 = scmp.eq.s32.totalorder %s27, 0
      %p96 = por %p94, %p95
      %s97 = ssub.s32 %s28, %s40
      %p98 = scmp.eq.s32.totalorder %s97, 0
      %s100 = sadd.s32 %s99, 1
      %s101 = scalar_select %p98, %s99, %s100
      %p104 = pneg %p98
      %p105 = scmp.eq.s32.totalorder %s21, 1
      %p106 = por %p104, %p105
      %p107 = scmp.ne.s32.totalorder %s99, %s102
      %p108 = scmp.eq.s32.totalorder %s21, 0
      %p109 = por %p107, %p108
      %p110 = scmp.ne.s32.totalorder %s99, %s102
      %p111 = scmp.eq.s32.totalorder %s26, 1
      %p112 = por %p110, %p111
      %p113 = scmp.ne.s32.totalorder %s102, %s103
      %p114 = scmp.eq.s32.totalorder %s26, 0
      %p115 = por %p113, %p114
      %p116 = scmp.ne.s32.totalorder %s102, %s103
      %p117 = scmp.eq.s32.totalorder %s27, 1
      %p118 = por %p116, %p117
      %p120 = scmp.ne.s32.totalorder %s103, %s119
      %p121 = scmp.eq.s32.totalorder %s27, 0
      %p122 = por %p120, %p121
      %s124 = sadd.s32 %s123, 1
      %p127 = scmp.eq.s32.totalorder %s21, 1
      %p128 = scmp.ne.s32.totalorder %s123, %s125
      %p129 = scmp.eq.s32.totalorder %s21, 0
      %p130 = por %p128, %p129
      %p131 = scmp.ne.s32.totalorder %s123, %s125
      %p132 = scmp.eq.s32.totalorder %s26, 1
      %p133 = por %p131, %p132
      %p134 = scmp.ne.s32.totalorder %s125, %s126
      %p135 = scmp.eq.s32.totalorder %s26, 0
      %p136 = por %p134, %p135
      %p137 = scmp.ne.s32.totalorder %s125, %s126
      %p138 = scmp.eq.s32.totalorder %s27, 1
      %p139 = por %p137, %p138
      %p141 = scmp.ne.s32.totalorder %s126, %s140
      %p142 = scmp.eq.s32.totalorder %s27, 0
      %p143 = por %p141, %p142
      %s145 = sadd.s32 %s144, 1
      %p148 = scmp.eq.s32.totalorder %s21, 1
      %p149 = scmp.ne.s32.totalorder %s144, %s146
      %p150 = scmp.eq.s32.totalorder %s21, 0
      %p151 = por %p149, %p150
      %p152 = scmp.ne.s32.totalorder %s144, %s146
      %p153 = scmp.eq.s32.totalorder %s26, 1
      %p154 = por %p152, %p153
      %p155 = scmp.ne.s32.totalorder %s146, %s147
      %p156 = scmp.eq.s32.totalorder %s26, 0
      %p157 = por %p155, %p156
      %p158 = scmp.ne.s32.totalorder %s146, %s147
      %p159 = scmp.eq.s32.totalorder %s27, 1
      %p160 = por %p158, %p159
      %p162 = scmp.ne.s32.totalorder %s147, %s161
      %p163 = scmp.eq.s32.totalorder %s27, 0
      %p164 = por %p162, %p163
      %s165 = ssub.s32 %s28, %s40
      %s166 = ssub.s32 %s29, %s36
      %s167 = sor.u32 %s165, %s166
      %p168 = scmp.eq.s32.totalorder %s167, 0
      %s170 = sadd.s32 %s169, 1
      %s171 = scalar_select %p168, %s169, %s170
      %p174 = pneg %p168
      %p175 = scmp.eq.s32.totalorder %s21, 1
      %p176 = por %p174, %p175
      %p177 = scmp.ne.s32.totalorder %s169, %s172
      %p178 = scmp.eq.s32.totalorder %s21, 0
      %p179 = por %p177, %p178
      %p180 = scmp.ne.s32.totalorder %s169, %s172
      %p181 = scmp.eq.s32.totalorder %s26, 1
      %p182 = por %p180, %p181
      %p183 = scmp.ne.s32.totalorder %s172, %s173
      %p184 = scmp.eq.s32.totalorder %s26, 0
      %p185 = por %p183, %p184
      %p186 = scmp.ne.s32.totalorder %s172, %s173
      %p187 = scmp.eq.s32.totalorder %s27, 1
      %p188 = por %p186, %p187
      %p190 = scmp.ne.s32.totalorder %s173, %s189
      %p191 = scmp.eq.s32.totalorder %s27, 0
      %p192 = por %p190, %p191
      %p193 = scmp.le.s32.totalorder 1, %s21
      %p194 = scmp.lt.s32.totalorder %s21, 3
      %p195 = pnand %p193, %p194
      %p196 = pneg %p195
      // Predicated region
      $region9: #{tpu_custom_call.1} parent=5 // pred_check
        _
      $region10: #{tpu_custom_call.1} parent=5 // pred_check_branch
        %198 = sbr.rel (%p195) target = $region12
      $region11: #{tpu_custom_call.1} parent=5 // pred_region
        %s199 = ssub.s32 %s21, 1
        // Predicated region
        $region13: #{tpu_custom_call.1} parent=11 // pred_check
          %p200 = pneg %p136
        $region14: #{tpu_custom_call.1} parent=11 // pred_check_branch
          %202 = sbr.rel (%p200) target = $region16
        $region15: #{tpu_custom_call.1} parent=11 // pred_region
          %s204 = ssub.s32 8192, 8192
          %205 = vsyncadd [#allocation9], %s204
          %s206 = sshll.u32 [#allocation8], 4
          %s207 = int_to_ptr.vmem [resolvable:$true] %s206
          %212 = dma.hbm_to_vmem [thread:$0]  %s3, 8192, %s207, [#allocation9], 1024, 1024, 64
        $region16: #{tpu_custom_call.1} parent=11 // pred_fallthru
          _
        // Predicated region
        $region17: #{tpu_custom_call.1} parent=11 // pred_check
          %p213 = pneg %p157
        $region18: #{tpu_custom_call.1} parent=11 // pred_check_branch
          %215 = sbr.rel (%p213) target = $region20
        $region19: #{tpu_custom_call.1} parent=11 // pred_region
          %s217 = ssub.s32 32768, 32768
          %218 = vsyncadd [#allocation9], %s217
          %s219 = sshll.u32 [#allocation10], 4
          %s220 = int_to_ptr.vmem [resolvable:$true] %s219
          %225 = dma.hbm_to_vmem [thread:$0]  %s4, 32768, %s220, [#allocation9], 1024, 1024, 64
        $region20: #{tpu_custom_call.1} parent=11 // pred_fallthru
          _
      $region12: #{tpu_custom_call.1} parent=5 // pred_fallthru
        _
      %p226 = scmp.lt.s32.totalorder %s21, 2
      // Predicated region
      $region21: #{tpu_custom_call.1} parent=5 // pred_check
        %p227 = pneg %p226
      $region22: #{tpu_custom_call.1} parent=5 // pred_check_branch
        %229 = sbr.rel (%p227) target = $region24
      $region23: #{tpu_custom_call.1} parent=5 // pred_region
        // Predicated region
        $region25: #{tpu_custom_call.1} parent=23 // pred_check
          %p230 = pneg %p55
        $region26: #{tpu_custom_call.1} parent=23 // pred_check_branch
          %232 = sbr.rel (%p230) target = $region28
        $region27: #{tpu_custom_call.1} parent=23 // pred_region
          %s233 = sand.u32 %s45, 1
          %s234 = scalar_lea.sflag [#allocation3], %s233
          %s235 = sand.u32 %s45, 1
          %s236 = smul.addr %s235, 8
          %s237 = scalar_lea.vmem [#allocation2], %s236
          %s239 = ssub.s32 128, 128
          %240 = vsyncadd %s234, %s239
          %s241 = sadd.s32 %s29, %s28
          %s242 = smul.addr %s241, 128
          %s243 = scalar_lea.hbm %s0, %s242
          %s245 = sshll.u32 %s237, 4
          %s246 = int_to_ptr.vmem [resolvable:$true] %s245
          %248 = dma.hbm_to_vmem [thread:$0]  %s243, 128, %s246, %s234
        $region28: #{tpu_custom_call.1} parent=23 // pred_fallthru
          _
        // Predicated region
        $region29: #{tpu_custom_call.1} parent=23 // pred_check
          %p249 = pneg %p83
        $region30: #{tpu_custom_call.1} parent=23 // pred_check_branch
          %251 = sbr.rel (%p249) target = $region32
        $region31: #{tpu_custom_call.1} parent=23 // pred_region
          %s252 = sand.u32 %s21, 1
          %s253 = scalar_lea.sflag [#allocation6], %s252
          %s254 = sand.u32 %s73, 1
          %s255 = smul.addr %s254, 16
          %s256 = scalar_lea.vmem [#allocation5], %s255
          %s258 = ssub.s32 256, 256
          %259 = vsyncadd %s253, %s258
          %s260 = smul.addr %s29, 2
          %s261 = smul.addr %s28, 2
          %s262 = sadd.s32 %s260, %s261
          %s263 = smul.addr %s262, 128
          %s264 = scalar_lea.hbm %s1, %s263
          %s266 = sshll.u32 %s256, 4
          %s267 = int_to_ptr.vmem [resolvable:$true] %s266
          %269 = dma.hbm_to_vmem [thread:$0]  %s264, 256, %s267, %s253
        $region32: #{tpu_custom_call.1} parent=23 // pred_fallthru
          _
        // Predicated region
        $region33: #{tpu_custom_call.1} parent=23 // pred_check
          %p270 = pneg %p109
        $region34: #{tpu_custom_call.1} parent=23 // pred_check_branch
          %272 = sbr.rel (%p270) target = $region36
        $region35: #{tpu_custom_call.1} parent=23 // pred_region
          %s273 = sand.u32 %s21, 1
          %s274 = scalar_lea.sflag [#allocation6], %s273
          %s275 = sand.u32 %s99, 1
          %s276 = smul.addr %s275, 8
          %s277 = scalar_lea.vmem [#allocation7], %s276
          %s279 = ssub.s32 128, 128
          %280 = vsyncadd %s274, %s279
          %s281 = smul.addr %s28, 8
          %s282 = smul.addr %s281, 16
          %s283 = scalar_lea.hbm %s2, %s282
          %s285 = sshll.u32 %s277, 4
          %s286 = int_to_ptr.vmem [resolvable:$true] %s285
          %288 = dma.hbm_to_vmem [thread:$0]  %s283, 128, %s286, %s274
        $region36: #{tpu_custom_call.1} parent=23 // pred_fallthru
          _
      $region24: #{tpu_custom_call.1} parent=5 // pred_fallthru
        _
      %p289 = scmp.le.s32.totalorder 1, %s21
      %p290 = scmp.lt.s32.totalorder %s21, 3
      %p291 = pnand %p289, %p290
      %p292 = pneg %p291
      // Predicated region
      $region37: #{tpu_custom_call.1} parent=5 // pred_check
        _
      $region38: #{tpu_custom_call.1} parent=5 // pred_check_branch
        %294 = sbr.rel (%p291) target = $region40
      $region39: #{tpu_custom_call.1} parent=5 // pred_region
        %s295 = ssub.s32 %s21, 1
        %s296 = sand.u32 %s48, 1
        %s297 = scalar_lea.sflag [#allocation3], %s296
        %s298 = sand.u32 %s48, 1
        %s299 = smul.addr %s298, 8
        %s300 = scalar_lea.vmem [#allocation2], %s299
        // Predicated region
        $region41: #{tpu_custom_call.1} parent=39 // pred_check
          %p301 = pneg %p61
        $region42: #{tpu_custom_call.1} parent=39 // pred_check_branch
          %303 = sbr.rel (%p301) target = $region44
        $region43: #{tpu_custom_call.1} parent=39 // pred_region
          %304 = dma.done %s297, 128
        $region44: #{tpu_custom_call.1} parent=39 // pred_fallthru
          _
        %s305 = sand.u32 %s26, 1
        %s306 = scalar_lea.sflag [#allocation6], %s305
        %s307 = sand.u32 %s76, 1
        %s308 = smul.addr %s307, 16
        %s309 = scalar_lea.vmem [#allocation5], %s308
        // Predicated region
        $region45: #{tpu_custom_call.1} parent=39 // pred_check
          %p310 = pneg %p89
        $region46: #{tpu_custom_call.1} parent=39 // pred_check_branch
          %312 = sbr.rel (%p310) target = $region48
        $region47: #{tpu_custom_call.1} parent=39 // pred_region
          %313 = dma.done %s306, 256
        $region48: #{tpu_custom_call.1} parent=39 // pred_fallthru
          _
        %s314 = sand.u32 %s26, 1
        %s315 = scalar_lea.sflag [#allocation6], %s314
        %s316 = sand.u32 %s102, 1
        %s317 = smul.addr %s316, 8
        %s318 = scalar_lea.vmem [#allocation7], %s317
        // Predicated region
        $region49: #{tpu_custom_call.1} parent=39 // pred_check
          %p319 = pneg %p115
        $region50: #{tpu_custom_call.1} parent=39 // pred_check_branch
          %321 = sbr.rel (%p319) target = $region52
        $region51: #{tpu_custom_call.1} parent=39 // pred_region
          %322 = dma.done %s315, 128
        $region52: #{tpu_custom_call.1} parent=39 // pred_fallthru
          _
        // Predicated region
        $region53: #{tpu_custom_call.1} parent=39 // pred_check
          %p323 = pneg %p136
        $region54: #{tpu_custom_call.1} parent=39 // pred_check_branch
          %325 = sbr.rel (%p323) target = $region56
        $region55: #{tpu_custom_call.1} parent=39 // pred_region
          %326 = dma.done [#allocation9], 8192
        $region56: #{tpu_custom_call.1} parent=39 // pred_fallthru
          _
        // Predicated region
        $region57: #{tpu_custom_call.1} parent=39 // pred_check
          %p327 = pneg %p157
        $region58: #{tpu_custom_call.1} parent=39 // pred_check_branch
          %329 = sbr.rel (%p327) target = $region60
        $region59: #{tpu_custom_call.1} parent=39 // pred_region
          %330 = dma.done [#allocation9], 32768
        $region60: #{tpu_custom_call.1} parent=39 // pred_fallthru
          _
        %s331 = sand.u32 %s48, 1
        %s332 = scalar_lea.sflag [#allocation3], %s331
        %s333 = sand.u32 %s48, 1
        %s334 = smul.addr %s333, 8
        %s335 = scalar_lea.vmem [#allocation2], %s334
        %p336 = pneg %p61
        %p337 = pneg %p58
        %s338 = sand.u32 %s26, 1
        %s339 = scalar_lea.sflag [#allocation6], %s338
        %s340 = sand.u32 %s76, 1
        %s341 = smul.addr %s340, 16
        %s342 = scalar_lea.vmem [#allocation5], %s341
        %p343 = pneg %p89
        %p344 = pneg %p86
        %s345 = sand.u32 %s26, 1
        %s346 = scalar_lea.sflag [#allocation6], %s345
        %s347 = sand.u32 %s102, 1
        %s348 = smul.addr %s347, 8
        %s349 = scalar_lea.vmem [#allocation7], %s348
        %p350 = pneg %p115
        %p351 = pneg %p112
        %p352 = pneg %p136
        %p353 = pneg %p133
        %p354 = pneg %p157
        %p355 = pneg %p154
        %p356 = pneg %p185
        %p357 = pneg %p182
        %s358 = sand.u32 %s172, 1
        %s359 = scalar_lea.sflag [#allocation4], %s358
        %s360 = sand.u32 %s172, 1
        %s361 = smul.addr %s360, 8
        %s362 = scalar_lea.vmem [#allocation11], %s361
        %v363 = vld [vmem:[%s300] sm:$0xff]
        %v364 = vld [vmem:[#allocation8] sm:$0xff]
        %v365 = vld [vmem:[#allocation8 + $0x8] sm:$0xff]
        %v366 = vld [vmem:[#allocation8 + $0x10] sm:$0xff]
        %v367 = vld [vmem:[#allocation8 + $0x18] sm:$0xff]
        %v368 = vld [vmem:[#allocation8 + $0x20] sm:$0xff]
        %v369 = vld [vmem:[#allocation8 + $0x28] sm:$0xff]
        %v370 = vld [vmem:[#allocation8 + $0x30] sm:$0xff]
        %v371 = vld [vmem:[#allocation8 + $0x38] sm:$0xff]
        %v372 = vld [vmem:[#allocation8 + $0x40] sm:$0xff]
        %v373 = vld [vmem:[#allocation8 + $0x48] sm:$0xff]
        %v374 = vld [vmem:[#allocation8 + $0x50] sm:$0xff]
        %v375 = vld [vmem:[#allocation8 + $0x58] sm:$0xff]
        %v376 = vld [vmem:[#allocation8 + $0x60] sm:$0xff]
        %v377 = vld [vmem:[#allocation8 + $0x68] sm:$0xff]
        %v378 = vld [vmem:[#allocation8 + $0x70] sm:$0xff]
        %v379 = vld [vmem:[#allocation8 + $0x78] sm:$0xff]
        %v380 = vld [vmem:[#allocation8 + $0x80] sm:$0xff]
        %v381 = vld [vmem:[#allocation8 + $0x88] sm:$0xff]
        %v382 = vld [vmem:[#allocation8 + $0x90] sm:$0xff]
        %v383 = vld [vmem:[#allocation8 + $0x98] sm:$0xff]
        %v384 = vld [vmem:[#allocation8 + $0xa0] sm:$0xff]
        %v385 = vld [vmem:[#allocation8 + $0xa8] sm:$0xff]
        %v386 = vld [vmem:[#allocation8 + $0xb0] sm:$0xff]
        %v387 = vld [vmem:[#allocation8 + $0xb8] sm:$0xff]
        %v388 = vld [vmem:[#allocation8 + $0xc0] sm:$0xff]
        %v389 = vld [vmem:[#allocation8 + $0xc8] sm:$0xff]
        %v390 = vld [vmem:[#allocation8 + $0xd0] sm:$0xff]
        %v391 = vld [vmem:[#allocation8 + $0xd8] sm:$0xff]
        %v392 = vld [vmem:[#allocation8 + $0xe0] sm:$0xff]
        %v393 = vld [vmem:[#allocation8 + $0xe8] sm:$0xff]
        %v394 = vld [vmem:[#allocation8 + $0xf0] sm:$0xff]
        %v395 = vld [vmem:[#allocation8 + $0xf8] sm:$0xff]
        %v396 = vld [vmem:[#allocation8 + $0x100] sm:$0xff]
        %v397 = vld [vmem:[#allocation8 + $0x108] sm:$0xff]
        %v398 = vld [vmem:[#allocation8 + $0x110] sm:$0xff]
        %v399 = vld [vmem:[#allocation8 + $0x118] sm:$0xff]
        %v400 = vld [vmem:[#allocation8 + $0x120] sm:$0xff]
        %v401 = vld [vmem:[#allocation8 + $0x128] sm:$0xff]
        %v402 = vld [vmem:[#allocation8 + $0x130] sm:$0xff]
        %v403 = vld [vmem:[#allocation8 + $0x138] sm:$0xff]
        %v404 = vld [vmem:[#allocation8 + $0x140] sm:$0xff]
        %v405 = vld [vmem:[#allocation8 + $0x148] sm:$0xff]
        %v406 = vld [vmem:[#allocation8 + $0x150] sm:$0xff]
        %v407 = vld [vmem:[#allocation8 + $0x158] sm:$0xff]
        %v408 = vld [vmem:[#allocation8 + $0x160] sm:$0xff]
        %v409 = vld [vmem:[#allocation8 + $0x168] sm:$0xff]
        %v410 = vld [vmem:[#allocation8 + $0x170] sm:$0xff]
        %v411 = vld [vmem:[#allocation8 + $0x178] sm:$0xff]
        %v412 = vld [vmem:[#allocation8 + $0x180] sm:$0xff]
        %v413 = vld [vmem:[#allocation8 + $0x188] sm:$0xff]
        %v414 = vld [vmem:[#allocation8 + $0x190] sm:$0xff]
        %v415 = vld [vmem:[#allocation8 + $0x198] sm:$0xff]
        %v416 = vld [vmem:[#allocation8 + $0x1a0] sm:$0xff]
        %v417 = vld [vmem:[#allocation8 + $0x1a8] sm:$0xff]
        %v418 = vld [vmem:[#allocation8 + $0x1b0] sm:$0xff]
        %v419 = vld [vmem:[#allocation8 + $0x1b8] sm:$0xff]
        %v420 = vld [vmem:[#allocation8 + $0x1c0] sm:$0xff]
        %v421 = vld [vmem:[#allocation8 + $0x1c8] sm:$0xff]
        %v422 = vld [vmem:[#allocation8 + $0x1d0] sm:$0xff]
        %v423 = vld [vmem:[#allocation8 + $0x1d8] sm:$0xff]
        %v424 = vld [vmem:[#allocation8 + $0x1e0] sm:$0xff]
        %v425 = vld [vmem:[#allocation8 + $0x1e8] sm:$0xff]
        %v426 = vld [vmem:[#allocation8 + $0x1f0] sm:$0xff]
        %v427 = vld [vmem:[#allocation8 + $0x1f8] sm:$0xff]
        %vm428 = vcmask 523264
        %v430 = vsel %vm428, %v363, 0
        %432 = vmatprep.subr.mxu0 %v365
        %433 = vmatpush1.msra.mxu0 %v364
        %434 = vmatprep.subr.mxu0 %v373
        %435 = vmatpush1.msra.mxu0 %v372
        %436 = vmatprep.subr.mxu0 %v381
        %437 = vmatpush1.msra.mxu0 %v380
        %438 = vmatprep.subr.mxu0 %v389
        %439 = vmatpush1.msra.mxu0 %v388
        %440 = vmatprep.subr.mxu0 %v397
        %441 = vmatpush1.msra.mxu0 %v396
        %442 = vmatprep.subr.mxu0 %v405
        %443 = vmatpush1.msra.mxu0 %v404
        %444 = vmatprep.subr.mxu0 %v413
        %445 = vmatpush1.msra.mxu0 %v412
        %446 = vmatprep.subr.mxu0 %v421
        %447 = vmatpush1.msra.mxu0 %v420
        %448 = vmatprep.subr.mxu0 0.0
        %449 = vmatpush1.msra.mxu0 0.0
        %450 = vmatprep.subr.mxu0 0.0
        %451 = vmatpush1.msra.mxu0 0.0
        %452 = vmatprep.subr.mxu0 0.0
        %453 = vmatpush1.msra.mxu0 0.0
        %454 = vmatprep.subr.mxu0 0.0
        %455 = vmatpush1.msra.mxu0 0.0
        %456 = vmatprep.subr.mxu0 0.0
        %457 = vmatpush1.msra.mxu0 0.0
        %458 = vmatprep.subr.mxu0 0.0
        %459 = vmatpush1.msra.mxu0 0.0
        %460 = vmatprep.subr.mxu0 0.0
        %461 = vmatpush1.msra.mxu0 0.0
        %462 = vmatprep.subr.mxu0 0.0
        %463 = vmatpush1.msra.mxu0 0.0
        %464 = vmatprep.subr.mxu0 0.0
        %465 = vmatpush1.msra.mxu0 0.0
        %466 = vmatprep.subr.mxu0 0.0
        %467 = vmatpush1.msra.mxu0 0.0
        %468 = vmatprep.subr.mxu0 0.0
        %469 = vmatpush1.msra.mxu0 0.0
        %470 = vmatprep.subr.mxu0 0.0
        %471 = vmatpush1.msra.mxu0 0.0
        %472 = vmatprep.subr.mxu0 0.0
        %473 = vmatpush1.msra.mxu0 0.0
        %474 = vmatprep.subr.mxu0 0.0
        %475 = vmatpush1.msra.mxu0 0.0
        %476 = vmatprep.subr.mxu0 0.0
        %477 = vmatpush1.msra.mxu0 0.0
        %478 = vmatprep.subr.mxu0 0.0
        %479 = vmatpush1.msra.mxu0 0.0
        %480 = vmatprep.subr.mxu0 0.0
        %481 = vmatpush1.msra.mxu0 0.0
        %482 = vmatprep.subr.mxu0 0.0
        %483 = vmatpush1.msra.mxu0 0.0
        %484 = vmatprep.subr.mxu0 0.0
        %485 = vmatpush1.msra.mxu0 0.0
        %486 = vmatprep.subr.mxu0 0.0
        %487 = vmatpush1.msra.mxu0 0.0
        %488 = vmatprep.subr.mxu0 0.0
        %489 = vmatpush1.msra.mxu0 0.0
        %490 = vmatprep.subr.mxu0 0.0
        %491 = vmatpush1.msra.mxu0 0.0
        %492 = vmatprep.subr.mxu0 0.0
        %493 = vmatpush1.msra.mxu0 0.0
        %494 = vmatprep.subr.mxu0 0.0
        %495 = vmatpush1.msra.mxu0 0.0
        %496 = vmatprep.mubr.f32.mxu0 0.0
        %497 = vmatmul.mubr.f32.gmra.mrb[0].mxu0 %v430
        %v498 = vpop.f32.mrb[0].mxu0
        %v499 = vadd.f32 0.0, %v498
        %v500 = vpop.f32.mrb[0].mxu0
        %v501 = vadd.f32 0.0, %v500
        %502 = vdwg.mxu0
        %503 = vmatprep.subr.mxu0 %v367
        %504 = vmatpush1.msra.mxu0 %v366
        %505 = vmatprep.subr.mxu0 %v375
        %506 = vmatpush1.msra.mxu0 %v374
        %507 = vmatprep.subr.mxu0 %v383
        %508 = vmatpush1.msra.mxu0 %v382
        %509 = vmatprep.subr.mxu0 %v391
        %510 = vmatpush1.msra.mxu0 %v390
        %511 = vmatprep.subr.mxu0 %v399
        %512 = vmatpush1.msra.mxu0 %v398
        %513 = vmatprep.subr.mxu0 %v407
        %514 = vmatpush1.msra.mxu0 %v406
        %515 = vmatprep.subr.mxu0 %v415
        %516 = vmatpush1.msra.mxu0 %v414
        %517 = vmatprep.subr.mxu0 %v423
        %518 = vmatpush1.msra.mxu0 %v422
        %519 = vmatprep.subr.mxu0 0.0
        %520 = vmatpush1.msra.mxu0 0.0
        %521 = vmatprep.subr.mxu0 0.0
        %522 = vmatpush1.msra.mxu0 0.0
        %523 = vmatprep.subr.mxu0 0.0
        %524 = vmatpush1.msra.mxu0 0.0
        %525 = vmatprep.subr.mxu0 0.0
        %526 = vmatpush1.msra.mxu0 0.0
        %527 = vmatprep.subr.mxu0 0.0
        %528 = vmatpush1.msra.mxu0 0.0
        %529 = vmatprep.subr.mxu0 0.0
        %530 = vmatpush1.msra.mxu0 0.0
        %531 = vmatprep.subr.mxu0 0.0
        %532 = vmatpush1.msra.mxu0 0.0
        %533 = vmatprep.subr.mxu0 0.0
        %534 = vmatpush1.msra.mxu0 0.0
        %535 = vmatprep.subr.mxu0 0.0
        %536 = vmatpush1.msra.mxu0 0.0
        %537 = vmatprep.subr.mxu0 0.0
        %538 = vmatpush1.msra.mxu0 0.0
        %539 = vmatprep.subr.mxu0 0.0
        %540 = vmatpush1.msra.mxu0 0.0
        %541 = vmatprep.subr.mxu0 0.0
        %542 = vmatpush1.msra.mxu0 0.0
        %543 = vmatprep.subr.mxu0 0.0
        %544 = vmatpush1.msra.mxu0 0.0
        %545 = vmatprep.subr.mxu0 0.0
        %546 = vmatpush1.msra.mxu0 0.0
        %547 = vmatprep.subr.mxu0 0.0
        %548 = vmatpush1.msra.mxu0 0.0
        %549 = vmatprep.subr.mxu0 0.0
        %550 = vmatpush1.msra.mxu0 0.0
        %551 = vmatprep.subr.mxu0 0.0
        %552 = vmatpush1.msra.mxu0 0.0
        %553 = vmatprep.subr.mxu0 0.0
        %554 = vmatpush1.msra.mxu0 0.0
        %555 = vmatprep.subr.mxu0 0.0
        %556 = vmatpush1.msra.mxu0 0.0
        %557 = vmatprep.subr.mxu0 0.0
        %558 = vmatpush1.msra.mxu0 0.0
        %559 = vmatprep.subr.mxu0 0.0
        %560 = vmatpush1.msra.mxu0 0.0
        %561 = vmatprep.subr.mxu0 0.0
        %562 = vmatpush1.msra.mxu0 0.0
        %563 = vmatprep.subr.mxu0 0.0
        %564 = vmatpush1.msra.mxu0 0.0
        %565 = vmatprep.subr.mxu0 0.0
        %566 = vmatpush1.msra.mxu0 0.0
        %567 = vmatprep.mubr.f32.mxu0 0.0
        %568 = vmatmul.mubr.f32.gmra.mrb[0].mxu0 %v430
        %v569 = vpop.f32.mrb[0].mxu0
        %v570 = vadd.f32 0.0, %v569
        %v571 = vpop.f32.mrb[0].mxu0
        %v572 = vadd.f32 0.0, %v571
        %573 = vdwg.mxu0
        %574 = vmatprep.subr.mxu0 %v369
        %575 = vmatpush1.msra.mxu0 %v368
        %576 = vmatprep.subr.mxu0 %v377
        %577 = vmatpush1.msra.mxu0 %v376
        %578 = vmatprep.subr.mxu0 %v385
        %579 = vmatpush1.msra.mxu0 %v384
        %580 = vmatprep.subr.mxu0 %v393
        %581 = vmatpush1.msra.mxu0 %v392
        %582 = vmatprep.subr.mxu0 %v401
        %583 = vmatpush1.msra.mxu0 %v400
        %584 = vmatprep.subr.mxu0 %v409
        %585 = vmatpush1.msra.mxu0 %v408
        %586 = vmatprep.subr.mxu0 %v417
        %587 = vmatpush1.msra.mxu0 %v416
        %588 = vmatprep.subr.mxu0 %v425
        %589 = vmatpush1.msra.mxu0 %v424
        %590 = vmatprep.subr.mxu0 0.0
        %591 = vmatpush1.msra.mxu0 0.0
        %592 = vmatprep.subr.mxu0 0.0
        %593 = vmatpush1.msra.mxu0 0.0
        %594 = vmatprep.subr.mxu0 0.0
        %595 = vmatpush1.msra.mxu0 0.0
        %596 = vmatprep.subr.mxu0 0.0
        %597 = vmatpush1.msra.mxu0 0.0
        %598 = vmatprep.subr.mxu0 0.0
        %599 = vmatpush1.msra.mxu0 0.0
        %600 = vmatprep.subr.mxu0 0.0
        %601 = vmatpush1.msra.mxu0 0.0
        %602 = vmatprep.subr.mxu0 0.0
        %603 = vmatpush1.msra.mxu0 0.0
        %604 = vmatprep.subr.mxu0 0.0
        %605 = vmatpush1.msra.mxu0 0.0
        %606 = vmatprep.subr.mxu0 0.0
        %607 = vmatpush1.msra.mxu0 0.0
        %608 = vmatprep.subr.mxu0 0.0
        %609 = vmatpush1.msra.mxu0 0.0
        %610 = vmatprep.subr.mxu0 0.0
        %611 = vmatpush1.msra.mxu0 0.0
        %612 = vmatprep.subr.mxu0 0.0
        %613 = vmatpush1.msra.mxu0 0.0
        %614 = vmatprep.subr.mxu0 0.0
        %615 = vmatpush1.msra.mxu0 0.0
        %616 = vmatprep.subr.mxu0 0.0
        %617 = vmatpush1.msra.mxu0 0.0
        %618 = vmatprep.subr.mxu0 0.0
        %619 = vmatpush1.msra.mxu0 0.0
        %620 = vmatprep.subr.mxu0 0.0
        %621 = vmatpush1.msra.mxu0 0.0
        %622 = vmatprep.subr.mxu0 0.0
        %623 = vmatpush1.msra.mxu0 0.0
        %624 = vmatprep.subr.mxu0 0.0
        %625 = vmatpush1.msra.mxu0 0.0
        %626 = vmatprep.subr.mxu0 0.0
        %627 = vmatpush1.msra.mxu0 0.0
        %628 = vmatprep.subr.mxu0 0.0
        %629 = vmatpush1.msra.mxu0 0.0
        %630 = vmatprep.subr.mxu0 0.0
        %631 = vmatpush1.msra.mxu0 0.0
        %632 = vmatprep.subr.mxu0 0.0
        %633 = vmatpush1.msra.mxu0 0.0
        %634 = vmatprep.subr.mxu0 0.0
        %635 = vmatpush1.msra.mxu0 0.0
        %636 = vmatprep.subr.mxu0 0.0
        %637 = vmatpush1.msra.mxu0 0.0
        %638 = vmatprep.mubr.f32.mxu0 0.0
        %639 = vmatmul.mubr.f32.gmra.mrb[0].mxu0 %v430
        %v640 = vpop.f32.mrb[0].mxu0
        %v641 = vadd.f32 0.0, %v640
        %v642 = vpop.f32.mrb[0].mxu0
        %v643 = vadd.f32 0.0, %v642
        %644 = vdwg.mxu0
        %645 = vmatprep.subr.mxu0 %v371
        %646 = vmatpush1.msra.mxu0 %v370
        %647 = vmatprep.subr.mxu0 %v379
        %648 = vmatpush1.msra.mxu0 %v378
        %649 = vmatprep.subr.mxu0 %v387
        %650 = vmatpush1.msra.mxu0 %v386
        %651 = vmatprep.subr.mxu0 %v395
        %652 = vmatpush1.msra.mxu0 %v394
        %653 = vmatprep.subr.mxu0 %v403
        %654 = vmatpush1.msra.mxu0 %v402
        %655 = vmatprep.subr.mxu0 %v411
        %656 = vmatpush1.msra.mxu0 %v410
        %657 = vmatprep.subr.mxu0 %v419
        %658 = vmatpush1.msra.mxu0 %v418
        %659 = vmatprep.subr.mxu0 %v427
        %660 = vmatpush1.msra.mxu0 %v426
        %661 = vmatprep.subr.mxu0 0.0
        %662 = vmatpush1.msra.mxu0 0.0
        %663 = vmatprep.subr.mxu0 0.0
        %664 = vmatpush1.msra.mxu0 0.0
        %665 = vmatprep.subr.mxu0 0.0
        %666 = vmatpush1.msra.mxu0 0.0
        %667 = vmatprep.subr.mxu0 0.0
        %668 = vmatpush1.msra.mxu0 0.0
        %669 = vmatprep.subr.mxu0 0.0
        %670 = vmatpush1.msra.mxu0 0.0
        %671 = vmatprep.subr.mxu0 0.0
        %672 = vmatpush1.msra.mxu0 0.0
        %673 = vmatprep.subr.mxu0 0.0
        %674 = vmatpush1.msra.mxu0 0.0
        %675 = vmatprep.subr.mxu0 0.0
        %676 = vmatpush1.msra.mxu0 0.0
        %677 = vmatprep.subr.mxu0 0.0
        %678 = vmatpush1.msra.mxu0 0.0
        %679 = vmatprep.subr.mxu0 0.0
        %680 = vmatpush1.msra.mxu0 0.0
        %681 = vmatprep.subr.mxu0 0.0
        %682 = vmatpush1.msra.mxu0 0.0
        %683 = vmatprep.subr.mxu0 0.0
        %684 = vmatpush1.msra.mxu0 0.0
        %685 = vmatprep.subr.mxu0 0.0
        %686 = vmatpush1.msra.mxu0 0.0
        %687 = vmatprep.subr.mxu0 0.0
        %688 = vmatpush1.msra.mxu0 0.0
        %689 = vmatprep.subr.mxu0 0.0
        %690 = vmatpush1.msra.mxu0 0.0
        %691 = vmatprep.subr.mxu0 0.0
        %692 = vmatpush1.msra.mxu0 0.0
        %693 = vmatprep.subr.mxu0 0.0
        %694 = vmatpush1.msra.mxu0 0.0
        %695 = vmatprep.subr.mxu0 0.0
        %696 = vmatpush1.msra.mxu0 0.0
        %697 = vmatprep.subr.mxu0 0.0
        %698 = vmatpush1.msra.mxu0 0.0
        %699 = vmatprep.subr.mxu0 0.0
        %700 = vmatpush1.msra.mxu0 0.0
        %701 = vmatprep.subr.mxu0 0.0
        %702 = vmatpush1.msra.mxu0 0.0
        %703 = vmatprep.subr.mxu0 0.0
        %704 = vmatpush1.msra.mxu0 0.0
        %705 = vmatprep.subr.mxu0 0.0
        %706 = vmatpush1.msra.mxu0 0.0
        %707 = vmatprep.subr.mxu0 0.0
        %708 = vmatpush1.msra.mxu0 0.0
        %709 = vmatprep.mubr.f32.mxu0 0.0
        %710 = vmatmul.mubr.f32.gmra.mrb[0].mxu0 %v430
        %v711 = vpop.f32.mrb[0].mxu0
        %v712 = vadd.f32 0.0, %v711
        %v713 = vpop.f32.mrb[0].mxu0
        %v714 = vadd.f32 0.0, %v713
        %715 = vdwg.mxu0
        %v716 = vld [vmem:[%s309] sm:$0xff]
        %v717 = vld [vmem:[%s309 + $0x8] sm:$0xff]
        %v718 = vld [vmem:[#allocation10] sm:$0xff]
        %v719 = vld [vmem:[#allocation10 + $0x8] sm:$0xff]
        %v720 = vld [vmem:[#allocation10 + $0x10] sm:$0xff]
        %v721 = vld [vmem:[#allocation10 + $0x18] sm:$0xff]
        %v722 = vld [vmem:[#allocation10 + $0x20] sm:$0xff]
        %v723 = vld [vmem:[#allocation10 + $0x28] sm:$0xff]
        %v724 = vld [vmem:[#allocation10 + $0x30] sm:$0xff]
        %v725 = vld [vmem:[#allocation10 + $0x38] sm:$0xff]
        %v726 = vld [vmem:[#allocation10 + $0x40] sm:$0xff]
        %v727 = vld [vmem:[#allocation10 + $0x48] sm:$0xff]
        %v728 = vld [vmem:[#allocation10 + $0x50] sm:$0xff]
        %v729 = vld [vmem:[#allocation10 + $0x58] sm:$0xff]
        %v730 = vld [vmem:[#allocation10 + $0x60] sm:$0xff]
        %v731 = vld [vmem:[#allocation10 + $0x68] sm:$0xff]
        %v732 = vld [vmem:[#allocation10 + $0x70] sm:$0xff]
        %v733 = vld [vmem:[#allocation10 + $0x78] sm:$0xff]
        %v734 = vld [vmem:[#allocation10 + $0x80] sm:$0xff]
        %v735 = vld [vmem:[#allocation10 + $0x88] sm:$0xff]
        %v736 = vld [vmem:[#allocation10 + $0x90] sm:$0xff]
        %v737 = vld [vmem:[#allocation10 + $0x98] sm:$0xff]
        %v738 = vld [vmem:[#allocation10 + $0xa0] sm:$0xff]
        %v739 = vld [vmem:[#allocation10 + $0xa8] sm:$0xff]
        %v740 = vld [vmem:[#allocation10 + $0xb0] sm:$0xff]
        %v741 = vld [vmem:[#allocation10 + $0xb8] sm:$0xff]
        %v742 = vld [vmem:[#allocation10 + $0xc0] sm:$0xff]
        %v743 = vld [vmem:[#allocation10 + $0xc8] sm:$0xff]
        %v744 = vld [vmem:[#allocation10 + $0xd0] sm:$0xff]
        %v745 = vld [vmem:[#allocation10 + $0xd8] sm:$0xff]
        %v746 = vld [vmem:[#allocation10 + $0xe0] sm:$0xff]
        %v747 = vld [vmem:[#allocation10 + $0xe8] sm:$0xff]
        %v748 = vld [vmem:[#allocation10 + $0xf0] sm:$0xff]
        %v749 = vld [vmem:[#allocation10 + $0xf8] sm:$0xff]
        %v750 = vld [vmem:[#allocation10 + $0x100] sm:$0xff]
        %v751 = vld [vmem:[#allocation10 + $0x108] sm:$0xff]
        %v752 = vld [vmem:[#allocation10 + $0x110] sm:$0xff]
        %v753 = vld [vmem:[#allocation10 + $0x118] sm:$0xff]
        %v754 = vld [vmem:[#allocation10 + $0x120] sm:$0xff]
        %v755 = vld [vmem:[#allocation10 + $0x128] sm:$0xff]
        %v756 = vld [vmem:[#allocation10 + $0x130] sm:$0xff]
        %v757 = vld [vmem:[#allocation10 + $0x138] sm:$0xff]
        %v758 = vld [vmem:[#allocation10 + $0x140] sm:$0xff]
        %v759 = vld [vmem:[#allocation10 + $0x148] sm:$0xff]
        %v760 = vld [vmem:[#allocation10 + $0x150] sm:$0xff]
        %v761 = vld [vmem:[#allocation10 + $0x158] sm:$0xff]
        %v762 = vld [vmem:[#allocation10 + $0x160] sm:$0xff]
        %v763 = vld [vmem:[#allocation10 + $0x168] sm:$0xff]
        %v764 = vld [vmem:[#allocation10 + $0x170] sm:$0xff]
        %v765 = vld [vmem:[#allocation10 + $0x178] sm:$0xff]
        %v766 = vld [vmem:[#allocation10 + $0x180] sm:$0xff]
        %v767 = vld [vmem:[#allocation10 + $0x188] sm:$0xff]
        %v768 = vld [vmem:[#allocation10 + $0x190] sm:$0xff]
        %v769 = vld [vmem:[#allocation10 + $0x198] sm:$0xff]
        %v770 = vld [vmem:[#allocation10 + $0x1a0] sm:$0xff]
        %v771 = vld [vmem:[#allocation10 + $0x1a8] sm:$0xff]
        %v772 = vld [vmem:[#allocation10 + $0x1b0] sm:$0xff]
        %v773 = vld [vmem:[#allocation10 + $0x1b8] sm:$0xff]
        %v774 = vld [vmem:[#allocation10 + $0x1c0] sm:$0xff]
        %v775 = vld [vmem:[#allocation10 + $0x1c8] sm:$0xff]
        %v776 = vld [vmem:[#allocation10 + $0x1d0] sm:$0xff]
        %v777 = vld [vmem:[#allocation10 + $0x1d8] sm:$0xff]
        %v778 = vld [vmem:[#allocation10 + $0x1e0] sm:$0xff]
        %v779 = vld [vmem:[#allocation10 + $0x1e8] sm:$0xff]
        %v780 = vld [vmem:[#allocation10 + $0x1f0] sm:$0xff]
        %v781 = vld [vmem:[#allocation10 + $0x1f8] sm:$0xff]
        %v782 = vld [vmem:[#allocation10 + $0x200] sm:$0xff]
        %v783 = vld [vmem:[#allocation10 + $0x208] sm:$0xff]
        %v784 = vld [vmem:[#allocation10 + $0x210] sm:$0xff]
        %v785 = vld [vmem:[#allocation10 + $0x218] sm:$0xff]
        %v786 = vld [vmem:[#allocation10 + $0x220] sm:$0xff]
        %v787 = vld [vmem:[#allocation10 + $0x228] sm:$0xff]
        %v788 = vld [vmem:[#allocation10 + $0x230] sm:$0xff]
        %v789 = vld [vmem:[#allocation10 + $0x238] sm:$0xff]
        %v790 = vld [vmem:[#allocation10 + $0x240] sm:$0xff]
        %v791 = vld [vmem:[#allocation10 + $0x248] sm:$0xff]
        %v792 = vld [vmem:[#allocation10 + $0x250] sm:$0xff]
        %v793 = vld [vmem:[#allocation10 + $0x258] sm:$0xff]
        %v794 = vld [vmem:[#allocation10 + $0x260] sm:$0xff]
        %v795 = vld [vmem:[#allocation10 + $0x268] sm:$0xff]
        %v796 = vld [vmem:[#allocation10 + $0x270] sm:$0xff]
        %v797 = vld [vmem:[#allocation10 + $0x278] sm:$0xff]
        %v798 = vld [vmem:[#allocation10 + $0x280] sm:$0xff]
        %v799 = vld [vmem:[#allocation10 + $0x288] sm:$0xff]
        %v800 = vld [vmem:[#allocation10 + $0x290] sm:$0xff]
        %v801 = vld [vmem:[#allocation10 + $0x298] sm:$0xff]
        %v802 = vld [vmem:[#allocation10 + $0x2a0] sm:$0xff]
        %v803 = vld [vmem:[#allocation10 + $0x2a8] sm:$0xff]
        %v804 = vld [vmem:[#allocation10 + $0x2b0] sm:$0xff]
        %v805 = vld [vmem:[#allocation10 + $0x2b8] sm:$0xff]
        %v806 = vld [vmem:[#allocation10 + $0x2c0] sm:$0xff]
        %v807 = vld [vmem:[#allocation10 + $0x2c8] sm:$0xff]
        %v808 = vld [vmem:[#allocation10 + $0x2d0] sm:$0xff]
        %v809 = vld [vmem:[#allocation10 + $0x2d8] sm:$0xff]
        %v810 = vld [vmem:[#allocation10 + $0x2e0] sm:$0xff]
        %v811 = vld [vmem:[#allocation10 + $0x2e8] sm:$0xff]
        %v812 = vld [vmem:[#allocation10 + $0x2f0] sm:$0xff]
        %v813 = vld [vmem:[#allocation10 + $0x2f8] sm:$0xff]
        %v814 = vld [vmem:[#allocation10 + $0x300] sm:$0xff]
        %v815 = vld [vmem:[#allocation10 + $0x308] sm:$0xff]
        %v816 = vld [vmem:[#allocation10 + $0x310] sm:$0xff]
        %v817 = vld [vmem:[#allocation10 + $0x318] sm:$0xff]
        %v818 = vld [vmem:[#allocation10 + $0x320] sm:$0xff]
        %v819 = vld [vmem:[#allocation10 + $0x328] sm:$0xff]
        %v820 = vld [vmem:[#allocation10 + $0x330] sm:$0xff]
        %v821 = vld [vmem:[#allocation10 + $0x338] sm:$0xff]
        %v822 = vld [vmem:[#allocation10 + $0x340] sm:$0xff]
        %v823 = vld [vmem:[#allocation10 + $0x348] sm:$0xff]
        %v824 = vld [vmem:[#allocation10 + $0x350] sm:$0xff]
        %v825 = vld [vmem:[#allocation10 + $0x358] sm:$0xff]
        %v826 = vld [vmem:[#allocation10 + $0x360] sm:$0xff]
        %v827 = vld [vmem:[#allocation10 + $0x368] sm:$0xff]
        %v828 = vld [vmem:[#allocation10 + $0x370] sm:$0xff]
        %v829 = vld [vmem:[#allocation10 + $0x378] sm:$0xff]
        %v830 = vld [vmem:[#allocation10 + $0x380] sm:$0xff]
        %v831 = vld [vmem:[#allocation10 + $0x388] sm:$0xff]
        %v832 = vld [vmem:[#allocation10 + $0x390] sm:$0xff]
        %v833 = vld [vmem:[#allocation10 + $0x398] sm:$0xff]
        %v834 = vld [vmem:[#allocation10 + $0x3a0] sm:$0xff]
        %v835 = vld [vmem:[#allocation10 + $0x3a8] sm:$0xff]
        %v836 = vld [vmem:[#allocation10 + $0x3b0] sm:$0xff]
        %v837 = vld [vmem:[#allocation10 + $0x3b8] sm:$0xff]
        %v838 = vld [vmem:[#allocation10 + $0x3c0] sm:$0xff]
        %v839 = vld [vmem:[#allocation10 + $0x3c8] sm:$0xff]
        %v840 = vld [vmem:[#allocation10 + $0x3d0] sm:$0xff]
        %v841 = vld [vmem:[#allocation10 + $0x3d8] sm:$0xff]
        %v842 = vld [vmem:[#allocation10 + $0x3e0] sm:$0xff]
        %v843 = vld [vmem:[#allocation10 + $0x3e8] sm:$0xff]
        %v844 = vld [vmem:[#allocation10 + $0x3f0] sm:$0xff]
        %v845 = vld [vmem:[#allocation10 + $0x3f8] sm:$0xff]
        %v846 = vld [vmem:[#allocation10 + $0x400] sm:$0xff]
        %v847 = vld [vmem:[#allocation10 + $0x408] sm:$0xff]
        %v848 = vld [vmem:[#allocation10 + $0x410] sm:$0xff]
        %v849 = vld [vmem:[#allocation10 + $0x418] sm:$0xff]
        %v850 = vld [vmem:[#allocation10 + $0x420] sm:$0xff]
        %v851 = vld [vmem:[#allocation10 + $0x428] sm:$0xff]
        %v852 = vld [vmem:[#allocation10 + $0x430] sm:$0xff]
        %v853 = vld [vmem:[#allocation10 + $0x438] sm:$0xff]
        %v854 = vld [vmem:[#allocation10 + $0x440] sm:$0xff]
        %v855 = vld [vmem:[#allocation10 + $0x448] sm:$0xff]
        %v856 = vld [vmem:[#allocation10 + $0x450] sm:$0xff]
        %v857 = vld [vmem:[#allocation10 + $0x458] sm:$0xff]
        %v858 = vld [vmem:[#allocation10 + $0x460] sm:$0xff]
        %v859 = vld [vmem:[#allocation10 + $0x468] sm:$0xff]
        %v860 = vld [vmem:[#allocation10 + $0x470] sm:$0xff]
        %v861 = vld [vmem:[#allocation10 + $0x478] sm:$0xff]
        %v862 = vld [vmem:[#allocation10 + $0x480] sm:$0xff]
        %v863 = vld [vmem:[#allocation10 + $0x488] sm:$0xff]
        %v864 = vld [vmem:[#allocation10 + $0x490] sm:$0xff]
        %v865 = vld [vmem:[#allocation10 + $0x498] sm:$0xff]
        %v866 = vld [vmem:[#allocation10 + $0x4a0] sm:$0xff]
        %v867 = vld [vmem:[#allocation10 + $0x4a8] sm:$0xff]
        %v868 = vld [vmem:[#allocation10 + $0x4b0] sm:$0xff]
        %v869 = vld [vmem:[#allocation10 + $0x4b8] sm:$0xff]
        %v870 = vld [vmem:[#allocation10 + $0x4c0] sm:$0xff]
        %v871 = vld [vmem:[#allocation10 + $0x4c8] sm:$0xff]
        %v872 = vld [vmem:[#allocation10 + $0x4d0] sm:$0xff]
        %v873 = vld [vmem:[#allocation10 + $0x4d8] sm:$0xff]
        %v874 = vld [vmem:[#allocation10 + $0x4e0] sm:$0xff]
        %v875 = vld [vmem:[#allocation10 + $0x4e8] sm:$0xff]
        %v876 = vld [vmem:[#allocation10 + $0x4f0] sm:$0xff]
        %v877 = vld [vmem:[#allocation10 + $0x4f8] sm:$0xff]
        %v878 = vld [vmem:[#allocation10 + $0x500] sm:$0xff]
        %v879 = vld [vmem:[#allocation10 + $0x508] sm:$0xff]
        %v880 = vld [vmem:[#allocation10 + $0x510] sm:$0xff]
        %v881 = vld [vmem:[#allocation10 + $0x518] sm:$0xff]
        %v882 = vld [vmem:[#allocation10 + $0x520] sm:$0xff]
        %v883 = vld [vmem:[#allocation10 + $0x528] sm:$0xff]
        %v884 = vld [vmem:[#allocation10 + $0x530] sm:$0xff]
        %v885 = vld [vmem:[#allocation10 + $0x538] sm:$0xff]
        %v886 = vld [vmem:[#allocation10 + $0x540] sm:$0xff]
        %v887 = vld [vmem:[#allocation10 + $0x548] sm:$0xff]
        %v888 = vld [vmem:[#allocation10 + $0x550] sm:$0xff]
        %v889 = vld [vmem:[#allocation10 + $0x558] sm:$0xff]
        %v890 = vld [vmem:[#allocation10 + $0x560] sm:$0xff]
        %v891 = vld [vmem:[#allocation10 + $0x568] sm:$0xff]
        %v892 = vld [vmem:[#allocation10 + $0x570] sm:$0xff]
        %v893 = vld [vmem:[#allocation10 + $0x578] sm:$0xff]
        %v894 = vld [vmem:[#allocation10 + $0x580] sm:$0xff]
        %v895 = vld [vmem:[#allocation10 + $0x588] sm:$0xff]
        %v896 = vld [vmem:[#allocation10 + $0x590] sm:$0xff]
        %v897 = vld [vmem:[#allocation10 + $0x598] sm:$0xff]
        %v898 = vld [vmem:[#allocation10 + $0x5a0] sm:$0xff]
        %v899 = vld [vmem:[#allocation10 + $0x5a8] sm:$0xff]
        %v900 = vld [vmem:[#allocation10 + $0x5b0] sm:$0xff]
        %v901 = vld [vmem:[#allocation10 + $0x5b8] sm:$0xff]
        %v902 = vld [vmem:[#allocation10 + $0x5c0] sm:$0xff]
        %v903 = vld [vmem:[#allocation10 + $0x5c8] sm:$0xff]
        %v904 = vld [vmem:[#allocation10 + $0x5d0] sm:$0xff]
        %v905 = vld [vmem:[#allocation10 + $0x5d8] sm:$0xff]
        %v906 = vld [vmem:[#allocation10 + $0x5e0] sm:$0xff]
        %v907 = vld [vmem:[#allocation10 + $0x5e8] sm:$0xff]
        %v908 = vld [vmem:[#allocation10 + $0x5f0] sm:$0xff]
        %v909 = vld [vmem:[#allocation10 + $0x5f8] sm:$0xff]
        %v910 = vld [vmem:[#allocation10 + $0x600] sm:$0xff]
        %v911 = vld [vmem:[#allocation10 + $0x608] sm:$0xff]
        %v912 = vld [vmem:[#allocation10 + $0x610] sm:$0xff]
        %v913 = vld [vmem:[#allocation10 + $0x618] sm:$0xff]
        %v914 = vld [vmem:[#allocation10 + $0x620] sm:$0xff]
        %v915 = vld [vmem:[#allocation10 + $0x628] sm:$0xff]
        %v916 = vld [vmem:[#allocation10 + $0x630] sm:$0xff]
        %v917 = vld [vmem:[#allocation10 + $0x638] sm:$0xff]
        %v918 = vld [vmem:[#allocation10 + $0x640] sm:$0xff]
        %v919 = vld [vmem:[#allocation10 + $0x648] sm:$0xff]
        %v920 = vld [vmem:[#allocation10 + $0x650] sm:$0xff]
        %v921 = vld [vmem:[#allocation10 + $0x658] sm:$0xff]
        %v922 = vld [vmem:[#allocation10 + $0x660] sm:$0xff]
        %v923 = vld [vmem:[#allocation10 + $0x668] sm:$0xff]
        %v924 = vld [vmem:[#allocation10 + $0x670] sm:$0xff]
        %v925 = vld [vmem:[#allocation10 + $0x678] sm:$0xff]
        %v926 = vld [vmem:[#allocation10 + $0x680] sm:$0xff]
        %v927 = vld [vmem:[#allocation10 + $0x688] sm:$0xff]
        %v928 = vld [vmem:[#allocation10 + $0x690] sm:$0xff]
        %v929 = vld [vmem:[#allocation10 + $0x698] sm:$0xff]
        %v930 = vld [vmem:[#allocation10 + $0x6a0] sm:$0xff]
        %v931 = vld [vmem:[#allocation10 + $0x6a8] sm:$0xff]
        %v932 = vld [vmem:[#allocation10 + $0x6b0] sm:$0xff]
        %v933 = vld [vmem:[#allocation10 + $0x6b8] sm:$0xff]
        %v934 = vld [vmem:[#allocation10 + $0x6c0] sm:$0xff]
        %v935 = vld [vmem:[#allocation10 + $0x6c8] sm:$0xff]
        %v936 = vld [vmem:[#allocation10 + $0x6d0] sm:$0xff]
        %v937 = vld [vmem:[#allocation10 + $0x6d8] sm:$0xff]
        %v938 = vld [vmem:[#allocation10 + $0x6e0] sm:$0xff]
        %v939 = vld [vmem:[#allocation10 + $0x6e8] sm:$0xff]
        %v940 = vld [vmem:[#allocation10 + $0x6f0] sm:$0xff]
        %v941 = vld [vmem:[#allocation10 + $0x6f8] sm:$0xff]
        %v942 = vld [vmem:[#allocation10 + $0x700] sm:$0xff]
        %v943 = vld [vmem:[#allocation10 + $0x708] sm:$0xff]
        %v944 = vld [vmem:[#allocation10 + $0x710] sm:$0xff]
        %v945 = vld [vmem:[#allocation10 + $0x718] sm:$0xff]
        %v946 = vld [vmem:[#allocation10 + $0x720] sm:$0xff]
        %v947 = vld [vmem:[#allocation10 + $0x728] sm:$0xff]
        %v948 = vld [vmem:[#allocation10 + $0x730] sm:$0xff]
        %v949 = vld [vmem:[#allocation10 + $0x738] sm:$0xff]
        %v950 = vld [vmem:[#allocation10 + $0x740] sm:$0xff]
        %v951 = vld [vmem:[#allocation10 + $0x748] sm:$0xff]
        %v952 = vld [vmem:[#allocation10 + $0x750] sm:$0xff]
        %v953 = vld [vmem:[#allocation10 + $0x758] sm:$0xff]
        %v954 = vld [vmem:[#allocation10 + $0x760] sm:$0xff]
        %v955 = vld [vmem:[#allocation10 + $0x768] sm:$0xff]
        %v956 = vld [vmem:[#allocation10 + $0x770] sm:$0xff]
        %v957 = vld [vmem:[#allocation10 + $0x778] sm:$0xff]
        %v958 = vld [vmem:[#allocation10 + $0x780] sm:$0xff]
        %v959 = vld [vmem:[#allocation10 + $0x788] sm:$0xff]
        %v960 = vld [vmem:[#allocation10 + $0x790] sm:$0xff]
        %v961 = vld [vmem:[#allocation10 + $0x798] sm:$0xff]
        %v962 = vld [vmem:[#allocation10 + $0x7a0] sm:$0xff]
        %v963 = vld [vmem:[#allocation10 + $0x7a8] sm:$0xff]
        %v964 = vld [vmem:[#allocation10 + $0x7b0] sm:$0xff]
        %v965 = vld [vmem:[#allocation10 + $0x7b8] sm:$0xff]
        %v966 = vld [vmem:[#allocation10 + $0x7c0] sm:$0xff]
        %v967 = vld [vmem:[#allocation10 + $0x7c8] sm:$0xff]
        %v968 = vld [vmem:[#allocation10 + $0x7d0] sm:$0xff]
        %v969 = vld [vmem:[#allocation10 + $0x7d8] sm:$0xff]
        %v970 = vld [vmem:[#allocation10 + $0x7e0] sm:$0xff]
        %v971 = vld [vmem:[#allocation10 + $0x7e8] sm:$0xff]
        %v972 = vld [vmem:[#allocation10 + $0x7f0] sm:$0xff]
        %v973 = vld [vmem:[#allocation10 + $0x7f8] sm:$0xff]
        %974 = vmatprep.subr.mxu0 %v719
        %975 = vmatpush1.msra.mxu0 %v718
        %976 = vmatprep.subr.mxu0 %v727
        %977 = vmatpush1.msra.mxu0 %v726
        %978 = vmatprep.subr.mxu0 %v735
        %979 = vmatpush1.msra.mxu0 %v734
        %980 = vmatprep.subr.mxu0 %v743
        %981 = vmatpush1.msra.mxu0 %v742
        %982 = vmatprep.subr.mxu0 %v751
        %983 = vmatpush1.msra.mxu0 %v750
        %984 = vmatprep.subr.mxu0 %v759
        %985 = vmatpush1.msra.mxu0 %v758
        %986 = vmatprep.subr.mxu0 %v767
        %987 = vmatpush1.msra.mxu0 %v766
        %988 = vmatprep.subr.mxu0 %v775
        %989 = vmatpush1.msra.mxu0 %v774
        %990 = vmatprep.subr.mxu0 %v783
        %991 = vmatpush1.msra.mxu0 %v782
        %992 = vmatprep.subr.mxu0 %v791
        %993 = vmatpush1.msra.mxu0 %v790
        %994 = vmatprep.subr.mxu0 %v799
        %995 = vmatpush1.msra.mxu0 %v798
        %996 = vmatprep.subr.mxu0 %v807
        %997 = vmatpush1.msra.mxu0 %v806
        %998 = vmatprep.subr.mxu0 %v815
        %999 = vmatpush1.msra.mxu0 %v814
        %1000 = vmatprep.subr.mxu0 %v823
        %1001 = vmatpush1.msra.mxu0 %v822
        %1002 = vmatprep.subr.mxu0 %v831
        %1003 = vmatpush1.msra.mxu0 %v830
        %1004 = vmatprep.subr.mxu0 %v839
        %1005 = vmatpush1.msra.mxu0 %v838
        %1006 = vmatprep.subr.mxu0 %v847
        %1007 = vmatpush1.msra.mxu0 %v846
        %1008 = vmatprep.subr.mxu0 %v855
        %1009 = vmatpush1.msra.mxu0 %v854
        %1010 = vmatprep.subr.mxu0 %v863
        %1011 = vmatpush1.msra.mxu0 %v862
        %1012 = vmatprep.subr.mxu0 %v871
        %1013 = vmatpush1.msra.mxu0 %v870
        %1014 = vmatprep.subr.mxu0 %v879
        %1015 = vmatpush1.msra.mxu0 %v878
        %1016 = vmatprep.subr.mxu0 %v887
        %1017 = vmatpush1.msra.mxu0 %v886
        %1018 = vmatprep.subr.mxu0 %v895
        %1019 = vmatpush1.msra.mxu0 %v894
        %1020 = vmatprep.subr.mxu0 %v903
        %1021 = vmatpush1.msra.mxu0 %v902
        %1022 = vmatprep.subr.mxu0 %v911
        %1023 = vmatpush1.msra.mxu0 %v910
        %1024 = vmatprep.subr.mxu0 %v919
        %1025 = vmatpush1.msra.mxu0 %v918
        %1026 = vmatprep.subr.mxu0 %v927
        %1027 = vmatpush1.msra.mxu0 %v926
        %1028 = vmatprep.subr.mxu0 %v935
        %1029 = vmatpush1.msra.mxu0 %v934
        %1030 = vmatprep.subr.mxu0 %v943
        %1031 = vmatpush1.msra.mxu0 %v942
        %1032 = vmatprep.subr.mxu0 %v951
        %1033 = vmatpush1.msra.mxu0 %v950
        %1034 = vmatprep.subr.mxu0 %v959
        %1035 = vmatpush1.msra.mxu0 %v958
        %1036 = vmatprep.subr.mxu0 %v967
        %1037 = vmatpush1.msra.mxu0 %v966
        %1038 = vmatprep.mubr.f32.mxu0 %v717
        %1039 = vmatmul.mubr.f32.gmra.mrb[0].mxu0 %v716
        %v1040 = vpop.f32.mrb[0].mxu0
        %v1041 = vadd.f32 0.0, %v1040
        %v1042 = vpop.f32.mrb[0].mxu0
        %v1043 = vadd.f32 0.0, %v1042
        %1044 = vdwg.mxu0
        %1045 = vmatprep.subr.mxu0 %v721
        %1046 = vmatpush1.msra.mxu0 %v720
        %1047 = vmatprep.subr.mxu0 %v729
        %1048 = vmatpush1.msra.mxu0 %v728
        %1049 = vmatprep.subr.mxu0 %v737
        %1050 = vmatpush1.msra.mxu0 %v736
        %1051 = vmatprep.subr.mxu0 %v745
        %1052 = vmatpush1.msra.mxu0 %v744
        %1053 = vmatprep.subr.mxu0 %v753
        %1054 = vmatpush1.msra.mxu0 %v752
        %1055 = vmatprep.subr.mxu0 %v761
        %1056 = vmatpush1.msra.mxu0 %v760
        %1057 = vmatprep.subr.mxu0 %v769
        %1058 = vmatpush1.msra.mxu0 %v768
        %1059 = vmatprep.subr.mxu0 %v777
        %1060 = vmatpush1.msra.mxu0 %v776
        %1061 = vmatprep.subr.mxu0 %v785
        %1062 = vmatpush1.msra.mxu0 %v784
        %1063 = vmatprep.subr.mxu0 %v793
        %1064 = vmatpush1.msra.mxu0 %v792
        %1065 = vmatprep.subr.mxu0 %v801
        %1066 = vmatpush1.msra.mxu0 %v800
        %1067 = vmatprep.subr.mxu0 %v809
        %1068 = vmatpush1.msra.mxu0 %v808
        %1069 = vmatprep.subr.mxu0 %v817
        %1070 = vmatpush1.msra.mxu0 %v816
        %1071 = vmatprep.subr.mxu0 %v825
        %1072 = vmatpush1.msra.mxu0 %v824
        %1073 = vmatprep.subr.mxu0 %v833
        %1074 = vmatpush1.msra.mxu0 %v832
        %1075 = vmatprep.subr.mxu0 %v841
        %1076 = vmatpush1.msra.mxu0 %v840
        %1077 = vmatprep.subr.mxu0 %v849
        %1078 = vmatpush1.msra.mxu0 %v848
        %1079 = vmatprep.subr.mxu0 %v857
        %1080 = vmatpush1.msra.mxu0 %v856
        %1081 = vmatprep.subr.mxu0 %v865
        %1082 = vmatpush1.msra.mxu0 %v864
        %1083 = vmatprep.subr.mxu0 %v873
        %1084 = vmatpush1.msra.mxu0 %v872
        %1085 = vmatprep.subr.mxu0 %v881
        %1086 = vmatpush1.msra.mxu0 %v880
        %1087 = vmatprep.subr.mxu0 %v889
        %1088 = vmatpush1.msra.mxu0 %v888
        %1089 = vmatprep.subr.mxu0 %v897
        %1090 = vmatpush1.msra.mxu0 %v896
        %1091 = vmatprep.subr.mxu0 %v905
        %1092 = vmatpush1.msra.mxu0 %v904
        %1093 = vmatprep.subr.mxu0 %v913
        %1094 = vmatpush1.msra.mxu0 %v912
        %1095 = vmatprep.subr.mxu0 %v921
        %1096 = vmatpush1.msra.mxu0 %v920
        %1097 = vmatprep.subr.mxu0 %v929
        %1098 = vmatpush1.msra.mxu0 %v928
        %1099 = vmatprep.subr.mxu0 %v937
        %1100 = vmatpush1.msra.mxu0 %v936
        %1101 = vmatprep.subr.mxu0 %v945
        %1102 = vmatpush1.msra.mxu0 %v944
        %1103 = vmatprep.subr.mxu0 %v953
        %1104 = vmatpush1.msra.mxu0 %v952
        %1105 = vmatprep.subr.mxu0 %v961
        %1106 = vmatpush1.msra.mxu0 %v960
        %1107 = vmatprep.subr.mxu0 %v969
        %1108 = vmatpush1.msra.mxu0 %v968
        %1109 = vmatprep.mubr.f32.mxu0 %v717
        %1110 = vmatmul.mubr.f32.gmra.mrb[0].mxu0 %v716
        %v1111 = vpop.f32.mrb[0].mxu0
        %v1112 = vadd.f32 0.0, %v1111
        %v1113 = vpop.f32.mrb[0].mxu0
        %v1114 = vadd.f32 0.0, %v1113
        %1115 = vdwg.mxu0
        %1116 = vmatprep.subr.mxu0 %v723
        %1117 = vmatpush1.msra.mxu0 %v722
        %1118 = vmatprep.subr.mxu0 %v731
        %1119 = vmatpush1.msra.mxu0 %v730
        %1120 = vmatprep.subr.mxu0 %v739
        %1121 = vmatpush1.msra.mxu0 %v738
        %1122 = vmatprep.subr.mxu0 %v747
        %1123 = vmatpush1.msra.mxu0 %v746
        %1124 = vmatprep.subr.mxu0 %v755
        %1125 = vmatpush1.msra.mxu0 %v754
        %1126 = vmatprep.subr.mxu0 %v763
        %1127 = vmatpush1.msra.mxu0 %v762
        %1128 = vmatprep.subr.mxu0 %v771
        %1129 = vmatpush1.msra.mxu0 %v770
        %1130 = vmatprep.subr.mxu0 %v779
        %1131 = vmatpush1.msra.mxu0 %v778
        %1132 = vmatprep.subr.mxu0 %v787
        %1133 = vmatpush1.msra.mxu0 %v786
        %1134 = vmatprep.subr.mxu0 %v795
        %1135 = vmatpush1.msra.mxu0 %v794
        %1136 = vmatprep.subr.mxu0 %v803
        %1137 = vmatpush1.msra.mxu0 %v802
        %1138 = vmatprep.subr.mxu0 %v811
        %1139 = vmatpush1.msra.mxu0 %v810
        %1140 = vmatprep.subr.mxu0 %v819
        %1141 = vmatpush1.msra.mxu0 %v818
        %1142 = vmatprep.subr.mxu0 %v827
        %1143 = vmatpush1.msra.mxu0 %v826
        %1144 = vmatprep.subr.mxu0 %v835
        %1145 = vmatpush1.msra.mxu0 %v834
        %1146 = vmatprep.subr.mxu0 %v843
        %1147 = vmatpush1.msra.mxu0 %v842
        %1148 = vmatprep.subr.mxu0 %v851
        %1149 = vmatpush1.msra.mxu0 %v850
        %1150 = vmatprep.subr.mxu0 %v859
        %1151 = vmatpush1.msra.mxu0 %v858
        %1152 = vmatprep.subr.mxu0 %v867
        %1153 = vmatpush1.msra.mxu0 %v866
        %1154 = vmatprep.subr.mxu0 %v875
        %1155 = vmatpush1.msra.mxu0 %v874
        %1156 = vmatprep.subr.mxu0 %v883
        %1157 = vmatpush1.msra.mxu0 %v882
        %1158 = vmatprep.subr.mxu0 %v891
        %1159 = vmatpush1.msra.mxu0 %v890
        %1160 = vmatprep.subr.mxu0 %v899
        %1161 = vmatpush1.msra.mxu0 %v898
        %1162 = vmatprep.subr.mxu0 %v907
        %1163 = vmatpush1.msra.mxu0 %v906
        %1164 = vmatprep.subr.mxu0 %v915
        %1165 = vmatpush1.msra.mxu0 %v914
        %1166 = vmatprep.subr.mxu0 %v923
        %1167 = vmatpush1.msra.mxu0 %v922
        %1168 = vmatprep.subr.mxu0 %v931
        %1169 = vmatpush1.msra.mxu0 %v930
        %1170 = vmatprep.subr.mxu0 %v939
        %1171 = vmatpush1.msra.mxu0 %v938
        %1172 = vmatprep.subr.mxu0 %v947
        %1173 = vmatpush1.msra.mxu0 %v946
        %1174 = vmatprep.subr.mxu0 %v955
        %1175 = vmatpush1.msra.mxu0 %v954
        %1176 = vmatprep.subr.mxu0 %v963
        %1177 = vmatpush1.msra.mxu0 %v962
        %1178 = vmatprep.subr.mxu0 %v971
        %1179 = vmatpush1.msra.mxu0 %v970
        %1180 = vmatprep.mubr.f32.mxu0 %v717
        %1181 = vmatmul.mubr.f32.gmra.mrb[0].mxu0 %v716
        %v1182 = vpop.f32.mrb[0].mxu0
        %v1183 = vadd.f32 0.0, %v1182
        %v1184 = vpop.f32.mrb[0].mxu0
        %v1185 = vadd.f32 0.0, %v1184
        %1186 = vdwg.mxu0
        %1187 = vmatprep.subr.mxu0 %v725
        %1188 = vmatpush1.msra.mxu0 %v724
        %1189 = vmatprep.subr.mxu0 %v733
        %1190 = vmatpush1.msra.mxu0 %v732
        %1191 = vmatprep.subr.mxu0 %v741
        %1192 = vmatpush1.msra.mxu0 %v740
        %1193 = vmatprep.subr.mxu0 %v749
        %1194 = vmatpush1.msra.mxu0 %v748
        %1195 = vmatprep.subr.mxu0 %v757
        %1196 = vmatpush1.msra.mxu0 %v756
        %1197 = vmatprep.subr.mxu0 %v765
        %1198 = vmatpush1.msra.mxu0 %v764
        %1199 = vmatprep.subr.mxu0 %v773
        %1200 = vmatpush1.msra.mxu0 %v772
        %1201 = vmatprep.subr.mxu0 %v781
        %1202 = vmatpush1.msra.mxu0 %v780
        %1203 = vmatprep.subr.mxu0 %v789
        %1204 = vmatpush1.msra.mxu0 %v788
        %1205 = vmatprep.subr.mxu0 %v797
        %1206 = vmatpush1.msra.mxu0 %v796
        %1207 = vmatprep.subr.mxu0 %v805
        %1208 = vmatpush1.msra.mxu0 %v804
        %1209 = vmatprep.subr.mxu0 %v813
        %1210 = vmatpush1.msra.mxu0 %v812
        %1211 = vmatprep.subr.mxu0 %v821
        %1212 = vmatpush1.msra.mxu0 %v820
        %1213 = vmatprep.subr.mxu0 %v829
        %1214 = vmatpush1.msra.mxu0 %v828
        %1215 = vmatprep.subr.mxu0 %v837
        %1216 = vmatpush1.msra.mxu0 %v836
        %1217 = vmatprep.subr.mxu0 %v845
        %1218 = vmatpush1.msra.mxu0 %v844
        %1219 = vmatprep.subr.mxu0 %v853
        %1220 = vmatpush1.msra.mxu0 %v852
        %1221 = vmatprep.subr.mxu0 %v861
        %1222 = vmatpush1.msra.mxu0 %v860
        %1223 = vmatprep.subr.mxu0 %v869
        %1224 = vmatpush1.msra.mxu0 %v868
        %1225 = vmatprep.subr.mxu0 %v877
        %1226 = vmatpush1.msra.mxu0 %v876
        %1227 = vmatprep.subr.mxu0 %v885
        %1228 = vmatpush1.msra.mxu0 %v884
        %1229 = vmatprep.subr.mxu0 %v893
        %1230 = vmatpush1.msra.mxu0 %v892
        %1231 = vmatprep.subr.mxu0 %v901
        %1232 = vmatpush1.msra.mxu0 %v900
        %1233 = vmatprep.subr.mxu0 %v909
        %1234 = vmatpush1.msra.mxu0 %v908
        %1235 = vmatprep.subr.mxu0 %v917
        %1236 = vmatpush1.msra.mxu0 %v916
        %1237 = vmatprep.subr.mxu0 %v925
        %1238 = vmatpush1.msra.mxu0 %v924
        %1239 = vmatprep.subr.mxu0 %v933
        %1240 = vmatpush1.msra.mxu0 %v932
        %1241 = vmatprep.subr.mxu0 %v941
        %1242 = vmatpush1.msra.mxu0 %v940
        %1243 = vmatprep.subr.mxu0 %v949
        %1244 = vmatpush1.msra.mxu0 %v948
        %1245 = vmatprep.subr.mxu0 %v957
        %1246 = vmatpush1.msra.mxu0 %v956
        %1247 = vmatprep.subr.mxu0 %v965
        %1248 = vmatpush1.msra.mxu0 %v964
        %1249 = vmatprep.subr.mxu0 %v973
        %1250 = vmatpush1.msra.mxu0 %v972
        %1251 = vmatprep.mubr.f32.mxu0 %v717
        %1252 = vmatmul.mubr.f32.gmra.mrb[0].mxu0 %v716
        %v1253 = vpop.f32.mrb[0].mxu0
        %v1254 = vadd.f32 0.0, %v1253
        %v1255 = vpop.f32.mrb[0].mxu0
        %v1256 = vadd.f32 0.0, %v1255
        %1257 = vdwg.mxu0
        %v1258 = vld [vmem:[%s318] sm:$0xff]
        %v1260 = vlaneseq
        %v1261 = vshrl.u32 %v1260, 7
        %v1262 = vsub.s32 0, %v1261
        %v1263 = vrot.slane %v1258, %v1262
        %v1264 = vlaneseq
        %v1265 = vshrl.u32 %v1264, 7
        %v1266 = vsub.s32 1, %v1265
        %v1267 = vrot.slane %v1258, %v1266
        %v1268 = vlaneseq
        %v1269 = vshrl.u32 %v1268, 7
        %v1270 = vsub.s32 2, %v1269
        %v1271 = vrot.slane %v1258, %v1270
        %v1272 = vlaneseq
        %v1273 = vshrl.u32 %v1272, 7
        %v1274 = vsub.s32 3, %v1273
        %v1275 = vrot.slane %v1258, %v1274
        %v1276 = vlaneseq
        %v1277 = vshrl.u32 %v1276, 7
        %v1278 = vsub.s32 4, %v1277
        %v1279 = vrot.slane %v1258, %v1278
        %v1280 = vlaneseq
        %v1281 = vshrl.u32 %v1280, 7
        %v1282 = vsub.s32 5, %v1281
        %v1283 = vrot.slane %v1258, %v1282
        %v1284 = vlaneseq
        %v1285 = vshrl.u32 %v1284, 7
        %v1286 = vsub.s32 6, %v1285
        %v1287 = vrot.slane %v1258, %v1286
        %v1288 = vlaneseq
        %v1289 = vshrl.u32 %v1288, 7
        %v1290 = vsub.s32 7, %v1289
        %v1291 = vrot.slane %v1258, %v1290
        %v1300 = vmul.f32 %v1041, %v1263
        %v1301 = vmul.f32 %v1043, %v1267
        %v1302 = vmul.f32 %v1112, %v1271
        %v1303 = vmul.f32 %v1114, %v1275
        %v1304 = vmul.f32 %v1183, %v1279
        %v1305 = vmul.f32 %v1185, %v1283
        %v1306 = vmul.f32 %v1254, %v1287
        %v1307 = vmul.f32 %v1256, %v1291
        %v1308 = vxor.u32 %v1300, 2147483648
        %v1309 = vxor.u32 %v1301, 2147483648
        %v1310 = vxor.u32 %v1302, 2147483648
        %v1311 = vxor.u32 %v1303, 2147483648
        %v1312 = vxor.u32 %v1304, 2147483648
        %v1313 = vxor.u32 %v1305, 2147483648
        %v1314 = vxor.u32 %v1306, 2147483648
        %v1315 = vxor.u32 %v1307, 2147483648
        %v1316 = vmul.f32 %v1308, 1.442695
        %v1317 = vpow.pop %v1316
        %v1318 = vmul.f32 %v1309, 1.442695
        %v1319 = vpow.pop %v1318
        %v1320 = vmul.f32 %v1310, 1.442695
        %v1321 = vpow.pop %v1320
        %v1322 = vmul.f32 %v1311, 1.442695
        %v1323 = vpow.pop %v1322
        %v1324 = vmul.f32 %v1312, 1.442695
        %v1325 = vpow.pop %v1324
        %v1326 = vmul.f32 %v1313, 1.442695
        %v1327 = vpow.pop %v1326
        %v1328 = vmul.f32 %v1314, 1.442695
        %v1329 = vpow.pop %v1328
        %v1330 = vmul.f32 %v1315, 1.442695
        %v1331 = vpow.pop %v1330
        %v1332 = vadd.f32 %v1317, 1.0
        %v1333 = vadd.f32 %v1319, 1.0
        %v1334 = vadd.f32 %v1321, 1.0
        %v1335 = vadd.f32 %v1323, 1.0
        %v1336 = vadd.f32 %v1325, 1.0
        %v1337 = vadd.f32 %v1327, 1.0
        %v1338 = vadd.f32 %v1329, 1.0
        %v1339 = vadd.f32 %v1331, 1.0
        %v1340 = vrcp.pop %v1332
        %v1341 = vmul.f32 1.0, %v1340
        %v1342 = vrcp.pop %v1333
        %v1343 = vmul.f32 1.0, %v1342
        %v1344 = vrcp.pop %v1334
        %v1345 = vmul.f32 1.0, %v1344
        %v1346 = vrcp.pop %v1335
        %v1347 = vmul.f32 1.0, %v1346
        %v1348 = vrcp.pop %v1336
        %v1349 = vmul.f32 1.0, %v1348
        %v1350 = vrcp.pop %v1337
        %v1351 = vmul.f32 1.0, %v1350
        %v1352 = vrcp.pop %v1338
        %v1353 = vmul.f32 1.0, %v1352
        %v1354 = vrcp.pop %v1339
        %v1355 = vmul.f32 1.0, %v1354
        %v1356 = vmin.f32 %v499, 0.0
        %v1357 = vmin.f32 %v501, 0.0
        %v1358 = vmin.f32 %v570, 0.0
        %v1359 = vmin.f32 %v572, 0.0
        %v1360 = vmin.f32 %v641, 0.0
        %v1361 = vmin.f32 %v643, 0.0
        %v1362 = vmin.f32 %v712, 0.0
        %v1363 = vmin.f32 %v714, 0.0
        %v1364 = vand.u32 2147483647, %v499
        %v1365 = vand.u32 2147483647, %v501
        %v1366 = vand.u32 2147483647, %v570
        %v1367 = vand.u32 2147483647, %v572
        %v1368 = vand.u32 2147483647, %v641
        %v1369 = vand.u32 2147483647, %v643
        %v1370 = vand.u32 2147483647, %v712
        %v1371 = vand.u32 2147483647, %v714
        %v1372 = vsub.f32 0.0, %v1364
        %v1373 = vsub.f32 0.0, %v1365
        %v1374 = vsub.f32 0.0, %v1366
        %v1375 = vsub.f32 0.0, %v1367
        %v1376 = vsub.f32 0.0, %v1368
        %v1377 = vsub.f32 0.0, %v1369
        %v1378 = vsub.f32 0.0, %v1370
        %v1379 = vsub.f32 0.0, %v1371
        %v1380 = vmul.f32 %v1372, 1.442695
        %v1381 = vpow.pop %v1380
        %v1382 = vmul.f32 %v1373, 1.442695
        %v1383 = vpow.pop %v1382
        %v1384 = vmul.f32 %v1374, 1.442695
        %v1385 = vpow.pop %v1384
        %v1386 = vmul.f32 %v1375, 1.442695
        %v1387 = vpow.pop %v1386
        %v1388 = vmul.f32 %v1376, 1.442695
        %v1389 = vpow.pop %v1388
        %v1390 = vmul.f32 %v1377, 1.442695
        %v1391 = vpow.pop %v1390
        %v1392 = vmul.f32 %v1378, 1.442695
        %v1393 = vpow.pop %v1392
        %v1394 = vmul.f32 %v1379, 1.442695
        %v1395 = vpow.pop %v1394
        %v1396 = vadd.f32 %v1381, 1.0
        %v1397 = vadd.f32 %v1383, 1.0
        %v1398 = vadd.f32 %v1385, 1.0
        %v1399 = vadd.f32 %v1387, 1.0
        %v1400 = vadd.f32 %v1389, 1.0
        %v1401 = vadd.f32 %v1391, 1.0
        %v1402 = vadd.f32 %v1393, 1.0
        %v1403 = vadd.f32 %v1395, 1.0
        %v1404 = vlog2.pop %v1396
        %v1405 = vmul.f32 %v1404, 0.6931472
        %v1406 = vlog2.pop %v1397
        %v1407 = vmul.f32 %v1406, 0.6931472
        %v1408 = vlog2.pop %v1398
        %v1409 = vmul.f32 %v1408, 0.6931472
        %v1410 = vlog2.pop %v1399
        %v1411 = vmul.f32 %v1410, 0.6931472
        %v1412 = vlog2.pop %v1400
        %v1413 = vmul.f32 %v1412, 0.6931472
        %v1414 = vlog2.pop %v1401
        %v1415 = vmul.f32 %v1414, 0.6931472
        %v1416 = vlog2.pop %v1402
        %v1417 = vmul.f32 %v1416, 0.6931472
        %v1418 = vlog2.pop %v1403
        %v1419 = vmul.f32 %v1418, 0.6931472
        %v1420 = vsub.f32 %v1356, %v1405
        %v1421 = vsub.f32 %v1357, %v1407
        %v1422 = vsub.f32 %v1358, %v1409
        %v1423 = vsub.f32 %v1359, %v1411
        %v1424 = vsub.f32 %v1360, %v1413
        %v1425 = vsub.f32 %v1361, %v1415
        %v1426 = vsub.f32 %v1362, %v1417
        %v1427 = vsub.f32 %v1363, %v1419
        %v1428 = vmax.f32 %v1420, -100.0
        %v1429 = vmax.f32 %v1421, -100.0
        %v1430 = vmax.f32 %v1422, -100.0
        %v1431 = vmax.f32 %v1423, -100.0
        %v1432 = vmax.f32 %v1424, -100.0
        %v1433 = vmax.f32 %v1425, -100.0
        %v1434 = vmax.f32 %v1426, -100.0
        %v1435 = vmax.f32 %v1427, -100.0
        %v1436 = vsub.f32 %v1420, %v499
        %v1437 = vsub.f32 %v1421, %v501
        %v1438 = vsub.f32 %v1422, %v570
        %v1439 = vsub.f32 %v1423, %v572
        %v1440 = vsub.f32 %v1424, %v641
        %v1441 = vsub.f32 %v1425, %v643
        %v1442 = vsub.f32 %v1426, %v712
        %v1443 = vsub.f32 %v1427, %v714
        %v1444 = vmax.f32 %v1436, -100.0
        %v1445 = vmax.f32 %v1437, -100.0
        %v1446 = vmax.f32 %v1438, -100.0
        %v1447 = vmax.f32 %v1439, -100.0
        %v1448 = vmax.f32 %v1440, -100.0
        %v1449 = vmax.f32 %v1441, -100.0
        %v1450 = vmax.f32 %v1442, -100.0
        %v1451 = vmax.f32 %v1443, -100.0
        %v1452 = vsub.f32 %v1428, %v1444
        %v1453 = vsub.f32 %v1429, %v1445
        %v1454 = vsub.f32 %v1430, %v1446
        %v1455 = vsub.f32 %v1431, %v1447
        %v1456 = vsub.f32 %v1432, %v1448
        %v1457 = vsub.f32 %v1433, %v1449
        %v1458 = vsub.f32 %v1434, %v1450
        %v1459 = vsub.f32 %v1435, %v1451
        %v1460 = vmul.f32 %v1341, %v1452
        %v1461 = vmul.f32 %v1343, %v1453
        %v1462 = vmul.f32 %v1345, %v1454
        %v1463 = vmul.f32 %v1347, %v1455
        %v1464 = vmul.f32 %v1349, %v1456
        %v1465 = vmul.f32 %v1351, %v1457
        %v1466 = vmul.f32 %v1353, %v1458
        %v1467 = vmul.f32 %v1355, %v1459
        %v1468 = vadd.f32 %v1444, %v1460
        %v1469 = vadd.f32 %v1445, %v1461
        %v1470 = vadd.f32 %v1446, %v1462
        %v1471 = vadd.f32 %v1447, %v1463
        %v1472 = vadd.f32 %v1448, %v1464
        %v1473 = vadd.f32 %v1449, %v1465
        %v1474 = vadd.f32 %v1450, %v1466
        %v1475 = vadd.f32 %v1451, %v1467
        %v1476 = vsub.f32 0.0, %v1468
        %v1477 = vsub.f32 0.0, %v1469
        %v1478 = vsub.f32 0.0, %v1470
        %v1479 = vsub.f32 0.0, %v1471
        %v1480 = vsub.f32 0.0, %v1472
        %v1481 = vsub.f32 0.0, %v1473
        %v1482 = vsub.f32 0.0, %v1474
        %v1483 = vsub.f32 0.0, %v1475
        %v1484 = vrot.slane %v1476, 4
        %v1485 = vadd.f32 %v1476, %v1484
        %v1486 = vrot.slane %v1485, 2
        %v1487 = vadd.f32 %v1485, %v1486
        %v1488 = vrot.slane %v1487, 1
        %v1489 = vadd.f32 %v1487, %v1488
        %v1490 = vrot.slane %v1477, 4
        %v1491 = vadd.f32 %v1477, %v1490
        %v1492 = vrot.slane %v1491, 2
        %v1493 = vadd.f32 %v1491, %v1492
        %v1494 = vrot.slane %v1493, 1
        %v1495 = vadd.f32 %v1493, %v1494
        %v1496 = vrot.slane %v1478, 4
        %v1497 = vadd.f32 %v1478, %v1496
        %v1498 = vrot.slane %v1497, 2
        %v1499 = vadd.f32 %v1497, %v1498
        %v1500 = vrot.slane %v1499, 1
        %v1501 = vadd.f32 %v1499, %v1500
        %v1502 = vrot.slane %v1479, 4
        %v1503 = vadd.f32 %v1479, %v1502
        %v1504 = vrot.slane %v1503, 2
        %v1505 = vadd.f32 %v1503, %v1504
        %v1506 = vrot.slane %v1505, 1
        %v1507 = vadd.f32 %v1505, %v1506
        %v1508 = vrot.slane %v1480, 4
        %v1509 = vadd.f32 %v1480, %v1508
        %v1510 = vrot.slane %v1509, 2
        %v1511 = vadd.f32 %v1509, %v1510
        %v1512 = vrot.slane %v1511, 1
        %v1513 = vadd.f32 %v1511, %v1512
        %v1514 = vrot.slane %v1481, 4
        %v1515 = vadd.f32 %v1481, %v1514
        %v1516 = vrot.slane %v1515, 2
        %v1517 = vadd.f32 %v1515, %v1516
        %v1518 = vrot.slane %v1517, 1
        %v1519 = vadd.f32 %v1517, %v1518
        %v1520 = vrot.slane %v1482, 4
        %v1521 = vadd.f32 %v1482, %v1520
        %v1522 = vrot.slane %v1521, 2
        %v1523 = vadd.f32 %v1521, %v1522
        %v1524 = vrot.slane %v1523, 1
        %v1525 = vadd.f32 %v1523, %v1524
        %v1526 = vrot.slane %v1483, 4
        %v1527 = vadd.f32 %v1483, %v1526
        %v1528 = vrot.slane %v1527, 2
        %v1529 = vadd.f32 %v1527, %v1528
        %v1530 = vrot.slane %v1529, 1
        %v1531 = vadd.f32 %v1529, %v1530
        %v1540 = vcombine.low %v1489, %v1495
        %v1541 = vcombine.low %v1501, %v1507
        %v1542 = vcombine.low %v1513, %v1519
        %v1543 = vcombine.low %v1525, %v1531
        %v1545 = vunpack.c.l.s4 1966171168
        %v1546 = vunpack.c.0.s8 %v1545
        %v1547 = vlaneseq
        %v1548 = vshrl.u32 %v1547, 7
        %v1549 = vsub.s32 %v1546, %v1548
        %v1550 = vrot.slane %v1540, %v1549
        %v1552 = vunpack.c.l.s4 1966171168
        %v1553 = vunpack.c.0.s8 %v1552
        %v1554 = vlaneseq
        %v1555 = vshrl.u32 %v1554, 7
        %v1556 = vsub.s32 %v1553, %v1555
        %v1557 = vrot.slane %v1541, %v1556
        %v1559 = vunpack.c.l.s4 1966171168
        %v1560 = vunpack.c.0.s8 %v1559
        %v1561 = vlaneseq
        %v1562 = vshrl.u32 %v1561, 7
        %v1563 = vsub.s32 %v1560, %v1562
        %v1564 = vrot.slane %v1542, %v1563
        %v1566 = vunpack.c.l.s4 1966171168
        %v1567 = vunpack.c.0.s8 %v1566
        %v1568 = vlaneseq
        %v1569 = vshrl.u32 %v1568, 7
        %v1570 = vsub.s32 %v1567, %v1569
        %v1571 = vrot.slane %v1543, %v1570
        %v1572 = vcombine.low %v1550, %v1557
        %v1573 = vcombine.low %v1564, %v1571
        %v1575 = vunpack.c.l.s4 1966171168
        %v1576 = vunpack.c.0.s8 %v1575
        %v1577 = vlaneseq
        %v1578 = vshrl.u32 %v1577, 7
        %v1579 = vsub.s32 %v1576, %v1578
        %v1580 = vrot.slane %v1572, %v1579
        %v1582 = vunpack.c.l.s4 1966171168
        %v1583 = vunpack.c.0.s8 %v1582
        %v1584 = vlaneseq
        %v1585 = vshrl.u32 %v1584, 7
        %v1586 = vsub.s32 %v1583, %v1585
        %v1587 = vrot.slane %v1573, %v1586
        %v1588 = vcombine.low %v1580, %v1587
        %1590 = vst [vmem:[%s362] sm:$0xff] %v1588
        %s1591 = sand.u32 %s172, 1
        %s1592 = scalar_lea.sflag [#allocation4], %s1591
        %s1593 = sand.u32 %s172, 1
        %s1594 = smul.addr %s1593, 8
        %s1595 = scalar_lea.vmem [#allocation11], %s1594
        // Predicated region
        $region61: #{tpu_custom_call.1} parent=39 // pred_check
          %p1596 = pneg %p182
        $region62: #{tpu_custom_call.1} parent=39 // pred_check_branch
          %1598 = sbr.rel (%p1596) target = $region64
        $region63: #{tpu_custom_call.1} parent=39 // pred_region
          %s1600 = ssub.s32 128, 128
          %1601 = vsyncadd %s1592, %s1600
          %s1602 = smul.addr %s31, 8
          %s1603 = smul.addr %s30, 8
          %s1604 = sadd.s32 %s1602, %s1603
          %s1605 = smul.addr %s1604, 16
          %s1606 = scalar_lea.hbm %s5, %s1605
          %s1608 = sshll.u32 %s1595, 4
          %s1609 = int_to_ptr.vmem [resolvable:$true] %s1608
          %1611 = dma.vmem_to_hbm [thread:$0]  %s1609, 128, %s1606, %s1592
        $region64: #{tpu_custom_call.1} parent=39 // pred_fallthru
          _
      $region40: #{tpu_custom_call.1} parent=5 // pred_fallthru
        _
      %p1612 = scmp.le.s32.totalorder 2, %s21
      // Predicated region
      $region65: #{tpu_custom_call.1} parent=5 // pred_check
        %p1613 = pneg %p1612
      $region66: #{tpu_custom_call.1} parent=5 // pred_check_branch
        %1615 = sbr.rel (%p1613) target = $region68
      $region67: #{tpu_custom_call.1} parent=5 // pred_region
        %s1616 = ssub.s32 %s21, 2
        // Predicated region
        $region69: #{tpu_custom_call.1} parent=67 // pred_check
          %p1617 = pneg %p188
        $region70: #{tpu_custom_call.1} parent=67 // pred_check_branch
          %1619 = sbr.rel (%p1617) target = $region72
        $region71: #{tpu_custom_call.1} parent=67 // pred_region
          %s1620 = sand.u32 %s173, 1
          %s1621 = scalar_lea.sflag [#allocation4], %s1620
          %s1622 = sand.u32 %s173, 1
          %s1623 = smul.addr %s1622, 8
          %s1624 = scalar_lea.vmem [#allocation11], %s1623
          %1625 = dma.done %s1621, 128
        $region72: #{tpu_custom_call.1} parent=67 // pred_fallthru
          _
      $region68: #{tpu_custom_call.1} parent=5 // pred_fallthru
        _
    $region6: #{tpu_custom_call.1} parent=1 // loop_footer
      %s25 = sadd.s32 1, %s21
    $region7: #{tpu_custom_call.1} parent=1 // loop_footer_branch
      %20 = sbr.rel target = $region3
    $region8: #{tpu_custom_call.1} parent=1 // loop_exit
      _
    %1626 = vsyncpa [#allocation3], 1
    %s1627 = scalar_lea.sflag [#allocation3], 1
    %1628 = vsyncpa %s1627, 1
    %1629 = vsyncpa [#allocation6], 1
    %s1630 = scalar_lea.sflag [#allocation6], 1
    %1631 = vsyncpa %s1630, 1
    %1632 = vsyncpa [#allocation9], 1
    %1633 = vsyncpa [#allocation4], 1
    %s1634 = scalar_lea.sflag [#allocation4], 1
    %1635 = vsyncpa %s1634, 1

</llo_original>
